<compile_context>
chip_gen: v7x
topology: tpu7x:2x2x1
jax: 0.10.0
libtpu: 0.0.40
codegen_flags: <defaults>
</compile_context>

<pallas_src>
import jax
import jax.numpy as jnp
from jax import lax
from jax.experimental import pallas as pl
from jax.experimental.pallas import tpu as pltpu

# ---- model hyper-parameters (consistent with the PyTorch module) ----
INPUT_DIM  = 16
D_MODEL    = 32
NHEAD      = 4
NUM_LAYERS = 2
DIM_FF     = 2048              # nn.TransformerEncoderLayer default dim_feedforward
LN_EPS     = 1e-5

BATCH      = 16
BATCH_TILE = BATCH             # one grid step: weights DMA'd once, no per-step overhead

# small-param slab layout (per layer): w_attn (32 rows), b_attn, ln1_w, ln1_b, ln2_w, ln2_b, b2
ROWS_PER_LAYER = D_MODEL + 6
SMALL_ROWS     = INPUT_DIM + 1 + NUM_LAYERS * ROWS_PER_LAYER   # emb_w + emb_b + per-layer rows


def _forward(x, small, b1, w):
    """Shared math for the kernel body (w is a VMEM ref) and the pure-JAX reference (w is an array).

    x     : (B, INPUT_DIM) f32
    small : (SMALL_ROWS, D_MODEL) f32  packed small params
    b1    : (NUM_LAYERS, 1, DIM_FF) f32
    w     : (2*NUM_LAYERS, D_MODEL, DIM_FF) bf16  -- w1[l] at 2l, w2[l]^T at 2l+1
    """
    f32 = jnp.float32
    bf16 = jnp.bfloat16

    emb_w = small[0:INPUT_DIM, :]                       # (INPUT_DIM, D_MODEL)
    emb_b = small[INPUT_DIM:INPUT_DIM + 1, :]           # (1, D_MODEL)
    h = jnp.dot(x.astype(f32), emb_w, preferred_element_type=f32) + emb_b

    for l in range(NUM_LAYERS):                         # static unroll (num_layers is small)
        base = INPUT_DIM + 1 + l * ROWS_PER_LAYER
        w_attn = small[base:base + D_MODEL, :]
        b_attn = small[base + D_MODEL + 0:base + D_MODEL + 1, :]
        ln1_w  = small[base + D_MODEL + 1:base + D_MODEL + 2, :]
        ln1_b  = small[base + D_MODEL + 2:base + D_MODEL + 3, :]
        ln2_w  = small[base + D_MODEL + 3:base + D_MODEL + 4, :]
        ln2_b  = small[base + D_MODEL + 4:base + D_MODEL + 5, :]
        b2     = small[base + D_MODEL + 5:base + D_MODEL + 6, :]

        # ---- self-attention, seq_len == 1: softmax == 1, so MHA == out_proj(V).
        # Wv@Wo / bv@Wo+bo were folded offline -> single small f32 matmul.
        sa = jnp.dot(h, w_attn, preferred_element_type=f32) + b_attn

        # ---- residual + LayerNorm1 (post-norm; dropout is identity at inference) ----
        x1 = h + sa
        mu = jnp.mean(x1, axis=-1, keepdims=True)
        var = jnp.mean((x1 - mu) ** 2, axis=-1, keepdims=True)
        h = (x1 - mu) * lax.rsqrt(var + LN_EPS) * ln1_w + ln1_b

        # ---- feed-forward: linear2(relu(linear1(x))), bf16 MXU inputs, f32 accumulation ----
        w1  = w[2 * l]                                  # (D_MODEL, DIM_FF) bf16, lane-dense
        w2t = w[2 * l + 1]                              # (D_MODEL, DIM_FF) bf16 == w2^T
        b1l = b1[l]                                     # (1, DIM_FF) f32
        hid = jnp.maximum(
            jnp.dot(h.astype(bf16), w1, preferred_element_type=f32) + b1l, 0.0)
        ff = lax.dot_general(hid.astype(bf16), w2t,
                             dimension_numbers=(((1,), (1,)), ((), ())),
                             preferred_element_type=f32) + b2

        # ---- residual + LayerNorm2 ----
        x2 = h + ff
        mu2 = jnp.mean(x2, axis=-1, keepdims=True)
        var2 = jnp.mean((x2 - mu2) ** 2, axis=-1, keepdims=True)
        h = (x2 - mu2) * lax.rsqrt(var2 + LN_EPS) * ln2_w + ln2_b

    return h


def transformer_kernel(x_ref, small_ref, b1_ref, w_ref, out_ref):
    h = _forward(x_ref[...], small_ref[...], b1_ref[...], w_ref)
    out_ref[...] = h.astype(out_ref.dtype)


def _full_spec(shape):
    zeros = (0,) * len(shape)
    return pl.BlockSpec(shape, lambda i, _z=zeros: _z)


@jax.jit
def time_series_transformer(x, small, b1, w_slab):
    B = x.shape[0]
    assert B % BATCH_TILE == 0
    grid = (B // BATCH_TILE,)                  # == (1,) at these shapes
    in_specs = [pl.BlockSpec((BATCH_TILE, INPUT_DIM), lambda i: (i, 0)),
                _full_spec(small.shape),
                _full_spec(b1.shape),
                _full_spec(w_slab.shape)]
    out_spec = pl.BlockSpec((BATCH_TILE, D_MODEL), lambda i: (i, 0))
    return pl.pallas_call(
        transformer_kernel,
        out_shape=jax.ShapeDtypeStruct((B, D_MODEL), jnp.float32),
        grid_spec=pltpu.PrefetchScalarGridSpec(
            num_scalar_prefetch=0,
            grid=grid,
            in_specs=in_specs,
            out_specs=out_spec),
        compiler_params=pltpu.CompilerParams(
            dimension_semantics=("arbitrary",)),
    )(x, small, b1, w_slab)


def init_params(key):
    ks = jax.random.split(key, 10)
    s = 0.02
    f32 = jnp.float32
    emb_w = jax.random.normal(ks[0], (INPUT_DIM, D_MODEL), f32) * s
    emb_b = jax.random.normal(ks[1], (1, D_MODEL), f32) * s
    # only the V slice of in_proj is mathematically used when seq_len == 1
    wv = jax.random.normal(ks[2], (NUM_LAYERS, D_MODEL, D_MODEL), f32) * s
    bv = jax.random.normal(ks[3], (NUM_LAYERS, 1, D_MODEL), f32) * s
    wo = jax.random.normal(ks[4], (NUM_LAYERS, D_MODEL, D_MODEL), f32) * s
    bo = jax.random.normal(ks[5], (NUM_LAYERS, 1, D_MODEL), f32) * s
    ln1_w = jnp.ones((NUM_LAYERS, 1, D_MODEL), f32)
    ln1_b = jnp.zeros((NUM_LAYERS, 1, D_MODEL), f32)
    ln2_w = jnp.ones((NUM_LAYERS, 1, D_MODEL), f32)
    ln2_b = jnp.zeros((NUM_LAYERS, 1, D_MODEL), f32)
    # FFN weights in bf16 (halves dominant HBM traffic; MXU takes bf16 natively with f32 accum).
    # NOTE: bf16 storage deviates from the f32 PyTorch weights at ~bf16 precision.
    w1 = (jax.random.normal(ks[6], (NUM_LAYERS, D_MODEL, DIM_FF), f32) * s).astype(jnp.bfloat16)
    b1 = jax.random.normal(ks[7], (NUM_LAYERS, 1, DIM_FF), f32) * s
    w2 = (jax.random.normal(ks[8], (NUM_LAYERS, DIM_FF, D_MODEL), f32) * s).astype(jnp.bfloat16)
    b2 = jax.random.normal(ks[9], (NUM_LAYERS, 1, D_MODEL), f32) * s

    # Fold the (seq_len == 1) attention offline: W_attn = Wv @ Wo, b_attn = bv @ Wo + bo.
    w_attn = jnp.einsum('lij,ljk->lik', wv, wo)            # (L, D, D)
    b_attn = jnp.einsum('lij,ljk->lik', bv, wo) + bo       # (L, 1, D)

    # Pack all small f32 params into one (SMALL_ROWS, D_MODEL) slab -> single DMA.
    rows = [emb_w, emb_b]
    for l in range(NUM_LAYERS):
        rows += [w_attn[l], b_attn[l], ln1_w[l], ln1_b[l], ln2_w[l], ln2_b[l], b2[l]]
    small = jnp.concatenate(rows, axis=0)
    assert small.shape == (SMALL_ROWS, D_MODEL)

    # Pack w1 and w2^T (lane-dense, rows of 2048) into one bf16 slab -> single DMA.
    blocks = []
    for l in range(NUM_LAYERS):
        blocks.append(w1[l])        # (D_MODEL, DIM_FF)
        blocks.append(w2[l].T)      # (D_MODEL, DIM_FF)
    w_slab = jnp.stack(blocks, axis=0)                     # (2L, D_MODEL, DIM_FF) bf16

    return small, b1, w_slab


if __name__ == "__main__":
    key = jax.random.PRNGKey(0)
    kx, kp = jax.random.split(key)
    x = jax.random.normal(kx, (BATCH, INPUT_DIM), jnp.float32)
    small, b1, w_slab = init_params(kp)

    out = jax.block_until_ready(time_series_transformer(x, small, b1, w_slab))

    # Pure-JAX reference with the SAME mixed precision (bf16 FFN matmul inputs, f32 accum).
    ref = _forward(x, small, b1, w_slab)

    assert out.shape == (BATCH, D_MODEL)
    max_err = float(jnp.abs(out - ref).max())
    assert jnp.allclose(out, ref, rtol=2e-3, atol=2e-3), max_err

    # TODO(synk): nn.Dropout(p=0.1) in training mode is stochastic; implemented as identity (eval semantics).
    print("KERNEL_OK")
</pallas_src>

<mosaic_0001>
module attributes {stable_mosaic.version = 11 : i64} {
  func.func @transformer_kernel(%arg0: i32, %arg1: memref<16x16xf32, #tpu.memory_space<vmem>>, %arg2: memref<93x32xf32, #tpu.memory_space<vmem>>, %arg3: memref<2x1x2048xf32, #tpu.memory_space<vmem>>, %arg4: memref<4x32x2048xbf16, #tpu.memory_space<vmem>>, %arg5: memref<16x32xf32, #tpu.memory_space<vmem>>) attributes {dimension_semantics = [#tpu.dimension_semantics<arbitrary>], iteration_bounds = array<i64: 1>, scalar_prefetch = 0 : i64, scratch_operands = 0 : i64, tpu.core_type = #tpu.core_type<tc>, window_params = [{transform_indices = @transform_0, window_bounds = array<i64: 16, 16>}, {pipeline_mode = #tpu.pipeline_mode<synchronous>, transform_indices = @transform_1, window_bounds = array<i64: 93, 32>}, {pipeline_mode = #tpu.pipeline_mode<synchronous>, transform_indices = @transform_2, window_bounds = array<i64: 2, 1, 2048>}, {pipeline_mode = #tpu.pipeline_mode<synchronous>, transform_indices = @transform_3, window_bounds = array<i64: 4, 32, 2048>}, {transform_indices = @transform_4, window_bounds = array<i64: 16, 32>}]} {
    %c0 = arith.constant 0 : index
    %c0_0 = arith.constant 0 : index
    %0 = vector.load %arg1[%c0, %c0_0] : memref<16x16xf32, #tpu.memory_space<vmem>>, vector<16x16xf32>
    %c0_1 = arith.constant 0 : index
    %c0_2 = arith.constant 0 : index
    %1 = vector.load %arg2[%c0_1, %c0_2] : memref<93x32xf32, #tpu.memory_space<vmem>>, vector<93x32xf32>
    %c0_3 = arith.constant 0 : index
    %c0_4 = arith.constant 0 : index
    %c0_5 = arith.constant 0 : index
    %2 = vector.load %arg3[%c0_3, %c0_4, %c0_5] : memref<2x1x2048xf32, #tpu.memory_space<vmem>>, vector<2x1x2048xf32>
    %3 = vector.extract_strided_slice %1 {offsets = [0, 0], sizes = [16, 32], strides = [1, 1]} : vector<93x32xf32> to vector<16x32xf32>
    %4 = vector.extract_strided_slice %1 {offsets = [16, 0], sizes = [1, 32], strides = [1, 1]} : vector<93x32xf32> to vector<1x32xf32>
    %cst = arith.constant dense<0.000000e+00> : vector<16x32xf32>
    %5 = tpu.matmul %0, %3, %cst {dimension_numbers = #tpu.dot_dimension_numbers<[1], [0], [0], [1], [0, 0, 1, 1], [], []>} : vector<16x16xf32>, vector<16x32xf32>, vector<16x32xf32> -> vector<16x32xf32>
    %6 = vector.broadcast %4 : vector<1x32xf32> to vector<16x32xf32>
    %7 = arith.addf %5, %6 : vector<16x32xf32>
    %8 = vector.extract_strided_slice %1 {offsets = [17, 0], sizes = [32, 32], strides = [1, 1]} : vector<93x32xf32> to vector<32x32xf32>
    %9 = vector.extract_strided_slice %1 {offsets = [49, 0], sizes = [1, 32], strides = [1, 1]} : vector<93x32xf32> to vector<1x32xf32>
    %10 = vector.extract_strided_slice %1 {offsets = [50, 0], sizes = [1, 32], strides = [1, 1]} : vector<93x32xf32> to vector<1x32xf32>
    %11 = vector.extract_strided_slice %1 {offsets = [51, 0], sizes = [1, 32], strides = [1, 1]} : vector<93x32xf32> to vector<1x32xf32>
    %12 = vector.extract_strided_slice %1 {offsets = [52, 0], sizes = [1, 32], strides = [1, 1]} : vector<93x32xf32> to vector<1x32xf32>
    %13 = vector.extract_strided_slice %1 {offsets = [53, 0], sizes = [1, 32], strides = [1, 1]} : vector<93x32xf32> to vector<1x32xf32>
    %14 = vector.extract_strided_slice %1 {offsets = [54, 0], sizes = [1, 32], strides = [1, 1]} : vector<93x32xf32> to vector<1x32xf32>
    %cst_6 = arith.constant dense<0.000000e+00> : vector<16x32xf32>
    %15 = tpu.matmul %7, %8, %cst_6 {dimension_numbers = #tpu.dot_dimension_numbers<[1], [0], [0], [1], [0, 0, 1, 1], [], []>} : vector<16x32xf32>, vector<32x32xf32>, vector<16x32xf32> -> vector<16x32xf32>
    %16 = vector.broadcast %9 : vector<1x32xf32> to vector<16x32xf32>
    %17 = arith.addf %15, %16 : vector<16x32xf32>
    %18 = arith.addf %7, %17 : vector<16x32xf32>
    %cst_7 = arith.constant dense<0.000000e+00> : vector<16xf32>
    %19 = vector.multi_reduction <add>, %18, %cst_7 [1] : vector<16x32xf32> to vector<16xf32>
    %20 = vector.shape_cast %19 : vector<16xf32> to vector<16x1xf32>
    %cst_8 = arith.constant 3.200000e+01 : f32
    %21 = vector.broadcast %cst_8 : f32 to vector<16x1xf32>
    %22 = arith.divf %20, %21 : vector<16x1xf32>
    %23 = vector.broadcast %22 : vector<16x1xf32> to vector<16x32xf32>
    %24 = arith.subf %18, %23 : vector<16x32xf32>
    %25 = arith.mulf %24, %24 : vector<16x32xf32>
    %cst_9 = arith.constant dense<0.000000e+00> : vector<16xf32>
    %26 = vector.multi_reduction <add>, %25, %cst_9 [1] : vector<16x32xf32> to vector<16xf32>
    %27 = vector.shape_cast %26 : vector<16xf32> to vector<16x1xf32>
    %cst_10 = arith.constant 3.200000e+01 : f32
    %28 = vector.broadcast %cst_10 : f32 to vector<16x1xf32>
    %29 = arith.divf %27, %28 : vector<16x1xf32>
    %30 = vector.broadcast %22 : vector<16x1xf32> to vector<16x32xf32>
    %31 = arith.subf %18, %30 : vector<16x32xf32>
    %cst_11 = arith.constant 9.99999974E-6 : f32
    %32 = vector.broadcast %cst_11 : f32 to vector<16x1xf32>
    %33 = arith.addf %29, %32 : vector<16x1xf32>
    %34 = math.rsqrt %33 : vector<16x1xf32>
    %35 = vector.broadcast %34 : vector<16x1xf32> to vector<16x32xf32>
    %36 = arith.mulf %31, %35 : vector<16x32xf32>
    %37 = vector.broadcast %10 : vector<1x32xf32> to vector<16x32xf32>
    %38 = arith.mulf %36, %37 : vector<16x32xf32>
    %39 = vector.broadcast %11 : vector<1x32xf32> to vector<16x32xf32>
    %40 = arith.addf %38, %39 : vector<16x32xf32>
    %c0_12 = arith.constant 0 : index
    %c0_13 = arith.constant 0 : index
    %c0_14 = arith.constant 0 : index
    %41 = vector.load %arg4[%c0_12, %c0_13, %c0_14] : memref<4x32x2048xbf16, #tpu.memory_space<vmem>>, vector<1x32x2048xbf16>
    %42 = vector.shape_cast %41 : vector<1x32x2048xbf16> to vector<32x2048xbf16>
    %c1 = arith.constant 1 : index
    %c0_15 = arith.constant 0 : index
    %c0_16 = arith.constant 0 : index
    %43 = vector.load %arg4[%c1, %c0_15, %c0_16] : memref<4x32x2048xbf16, #tpu.memory_space<vmem>>, vector<1x32x2048xbf16>
    %44 = vector.shape_cast %43 : vector<1x32x2048xbf16> to vector<32x2048xbf16>
    %45 = vector.extract_strided_slice %2 {offsets = [0, 0, 0], sizes = [1, 1, 2048], strides = [1, 1, 1]} : vector<2x1x2048xf32> to vector<1x1x2048xf32>
    %46 = vector.shape_cast %45 : vector<1x1x2048xf32> to vector<1x2048xf32>
    %47 = arith.truncf %40 : vector<16x32xf32> to vector<16x32xbf16>
    %cst_17 = arith.constant dense<0.000000e+00> : vector<16x2048xf32>
    %48 = tpu.matmul %47, %42, %cst_17 {dimension_numbers = #tpu.dot_dimension_numbers<[1], [0], [0], [1], [0, 0, 1, 1], [], []>} : vector<16x32xbf16>, vector<32x2048xbf16>, vector<16x2048xf32> -> vector<16x2048xf32>
    %49 = vector.broadcast %46 : vector<1x2048xf32> to vector<16x2048xf32>
    %50 = arith.addf %48, %49 : vector<16x2048xf32>
    %cst_18 = arith.constant 0.000000e+00 : f32
    %51 = vector.broadcast %cst_18 : f32 to vector<16x2048xf32>
    %52 = arith.maximumf %50, %51 : vector<16x2048xf32>
    %53 = arith.truncf %52 : vector<16x2048xf32> to vector<16x2048xbf16>
    %cst_19 = arith.constant dense<0.000000e+00> : vector<16x32xf32>
    %54 = tpu.matmul %53, %44, %cst_19 {dimension_numbers = #tpu.dot_dimension_numbers<[1], [1], [0], [0], [0, 0, 1, 0], [], []>} : vector<16x2048xbf16>, vector<32x2048xbf16>, vector<16x32xf32> -> vector<16x32xf32>
    %55 = vector.broadcast %14 : vector<1x32xf32> to vector<16x32xf32>
    %56 = arith.addf %54, %55 : vector<16x32xf32>
    %57 = arith.addf %40, %56 : vector<16x32xf32>
    %cst_20 = arith.constant dense<0.000000e+00> : vector<16xf32>
    %58 = vector.multi_reduction <add>, %57, %cst_20 [1] : vector<16x32xf32> to vector<16xf32>
    %59 = vector.shape_cast %58 : vector<16xf32> to vector<16x1xf32>
    %cst_21 = arith.constant 3.200000e+01 : f32
    %60 = vector.broadcast %cst_21 : f32 to vector<16x1xf32>
    %61 = arith.divf %59, %60 : vector<16x1xf32>
    %62 = vector.broadcast %61 : vector<16x1xf32> to vector<16x32xf32>
    %63 = arith.subf %57, %62 : vector<16x32xf32>
    %64 = arith.mulf %63, %63 : vector<16x32xf32>
    %cst_22 = arith.constant dense<0.000000e+00> : vector<16xf32>
    %65 = vector.multi_reduction <add>, %64, %cst_22 [1] : vector<16x32xf32> to vector<16xf32>
    %66 = vector.shape_cast %65 : vector<16xf32> to vector<16x1xf32>
    %cst_23 = arith.constant 3.200000e+01 : f32
    %67 = vector.broadcast %cst_23 : f32 to vector<16x1xf32>
    %68 = arith.divf %66, %67 : vector<16x1xf32>
    %69 = vector.broadcast %61 : vector<16x1xf32> to vector<16x32xf32>
    %70 = arith.subf %57, %69 : vector<16x32xf32>
    %cst_24 = arith.constant 9.99999974E-6 : f32
    %71 = vector.broadcast %cst_24 : f32 to vector<16x1xf32>
    %72 = arith.addf %68, %71 : vector<16x1xf32>
    %73 = math.rsqrt %72 : vector<16x1xf32>
    %74 = vector.broadcast %73 : vector<16x1xf32> to vector<16x32xf32>
    %75 = arith.mulf %70, %74 : vector<16x32xf32>
    %76 = vector.broadcast %12 : vector<1x32xf32> to vector<16x32xf32>
    %77 = arith.mulf %75, %76 : vector<16x32xf32>
    %78 = vector.broadcast %13 : vector<1x32xf32> to vector<16x32xf32>
    %79 = arith.addf %77, %78 : vector<16x32xf32>
    %80 = vector.extract_strided_slice %1 {offsets = [55, 0], sizes = [32, 32], strides = [1, 1]} : vector<93x32xf32> to vector<32x32xf32>
    %81 = vector.extract_strided_slice %1 {offsets = [87, 0], sizes = [1, 32], strides = [1, 1]} : vector<93x32xf32> to vector<1x32xf32>
    %82 = vector.extract_strided_slice %1 {offsets = [88, 0], sizes = [1, 32], strides = [1, 1]} : vector<93x32xf32> to vector<1x32xf32>
    %83 = vector.extract_strided_slice %1 {offsets = [89, 0], sizes = [1, 32], strides = [1, 1]} : vector<93x32xf32> to vector<1x32xf32>
    %84 = vector.extract_strided_slice %1 {offsets = [90, 0], sizes = [1, 32], strides = [1, 1]} : vector<93x32xf32> to vector<1x32xf32>
    %85 = vector.extract_strided_slice %1 {offsets = [91, 0], sizes = [1, 32], strides = [1, 1]} : vector<93x32xf32> to vector<1x32xf32>
    %86 = vector.extract_strided_slice %1 {offsets = [92, 0], sizes = [1, 32], strides = [1, 1]} : vector<93x32xf32> to vector<1x32xf32>
    %cst_25 = arith.constant dense<0.000000e+00> : vector<16x32xf32>
    %87 = tpu.matmul %79, %80, %cst_25 {dimension_numbers = #tpu.dot_dimension_numbers<[1], [0], [0], [1], [0, 0, 1, 1], [], []>} : vector<16x32xf32>, vector<32x32xf32>, vector<16x32xf32> -> vector<16x32xf32>
    %88 = vector.broadcast %81 : vector<1x32xf32> to vector<16x32xf32>
    %89 = arith.addf %87, %88 : vector<16x32xf32>
    %90 = arith.addf %79, %89 : vector<16x32xf32>
    %cst_26 = arith.constant dense<0.000000e+00> : vector<16xf32>
    %91 = vector.multi_reduction <add>, %90, %cst_26 [1] : vector<16x32xf32> to vector<16xf32>
    %92 = vector.shape_cast %91 : vector<16xf32> to vector<16x1xf32>
    %cst_27 = arith.constant 3.200000e+01 : f32
    %93 = vector.broadcast %cst_27 : f32 to vector<16x1xf32>
    %94 = arith.divf %92, %93 : vector<16x1xf32>
    %95 = vector.broadcast %94 : vector<16x1xf32> to vector<16x32xf32>
    %96 = arith.subf %90, %95 : vector<16x32xf32>
    %97 = arith.mulf %96, %96 : vector<16x32xf32>
    %cst_28 = arith.constant dense<0.000000e+00> : vector<16xf32>
    %98 = vector.multi_reduction <add>, %97, %cst_28 [1] : vector<16x32xf32> to vector<16xf32>
    %99 = vector.shape_cast %98 : vector<16xf32> to vector<16x1xf32>
    %cst_29 = arith.constant 3.200000e+01 : f32
    %100 = vector.broadcast %cst_29 : f32 to vector<16x1xf32>
    %101 = arith.divf %99, %100 : vector<16x1xf32>
    %102 = vector.broadcast %94 : vector<16x1xf32> to vector<16x32xf32>
    %103 = arith.subf %90, %102 : vector<16x32xf32>
    %cst_30 = arith.constant 9.99999974E-6 : f32
    %104 = vector.broadcast %cst_30 : f32 to vector<16x1xf32>
    %105 = arith.addf %101, %104 : vector<16x1xf32>
    %106 = math.rsqrt %105 : vector<16x1xf32>
    %107 = vector.broadcast %106 : vector<16x1xf32> to vector<16x32xf32>
    %108 = arith.mulf %103, %107 : vector<16x32xf32>
    %109 = vector.broadcast %82 : vector<1x32xf32> to vector<16x32xf32>
    %110 = arith.mulf %108, %109 : vector<16x32xf32>
    %111 = vector.broadcast %83 : vector<1x32xf32> to vector<16x32xf32>
    %112 = arith.addf %110, %111 : vector<16x32xf32>
    %c2 = arith.constant 2 : index
    %c0_31 = arith.constant 0 : index
    %c0_32 = arith.constant 0 : index
    %113 = vector.load %arg4[%c2, %c0_31, %c0_32] : memref<4x32x2048xbf16, #tpu.memory_space<vmem>>, vector<1x32x2048xbf16>
    %114 = vector.shape_cast %113 : vector<1x32x2048xbf16> to vector<32x2048xbf16>
    %c3 = arith.constant 3 : index
    %c0_33 = arith.constant 0 : index
    %c0_34 = arith.constant 0 : index
    %115 = vector.load %arg4[%c3, %c0_33, %c0_34] : memref<4x32x2048xbf16, #tpu.memory_space<vmem>>, vector<1x32x2048xbf16>
    %116 = vector.shape_cast %115 : vector<1x32x2048xbf16> to vector<32x2048xbf16>
    %117 = vector.extract_strided_slice %2 {offsets = [1, 0, 0], sizes = [1, 1, 2048], strides = [1, 1, 1]} : vector<2x1x2048xf32> to vector<1x1x2048xf32>
    %118 = vector.shape_cast %117 : vector<1x1x2048xf32> to vector<1x2048xf32>
    %119 = arith.truncf %112 : vector<16x32xf32> to vector<16x32xbf16>
    %cst_35 = arith.constant dense<0.000000e+00> : vector<16x2048xf32>
    %120 = tpu.matmul %119, %114, %cst_35 {dimension_numbers = #tpu.dot_dimension_numbers<[1], [0], [0], [1], [0, 0, 1, 1], [], []>} : vector<16x32xbf16>, vector<32x2048xbf16>, vector<16x2048xf32> -> vector<16x2048xf32>
    %121 = vector.broadcast %118 : vector<1x2048xf32> to vector<16x2048xf32>
    %122 = arith.addf %120, %121 : vector<16x2048xf32>
    %cst_36 = arith.constant 0.000000e+00 : f32
    %123 = vector.broadcast %cst_36 : f32 to vector<16x2048xf32>
    %124 = arith.maximumf %122, %123 : vector<16x2048xf32>
    %125 = arith.truncf %124 : vector<16x2048xf32> to vector<16x2048xbf16>
    %cst_37 = arith.constant dense<0.000000e+00> : vector<16x32xf32>
    %126 = tpu.matmul %125, %116, %cst_37 {dimension_numbers = #tpu.dot_dimension_numbers<[1], [1], [0], [0], [0, 0, 1, 0], [], []>} : vector<16x2048xbf16>, vector<32x2048xbf16>, vector<16x32xf32> -> vector<16x32xf32>
    %127 = vector.broadcast %86 : vector<1x32xf32> to vector<16x32xf32>
    %128 = arith.addf %126, %127 : vector<16x32xf32>
    %129 = arith.addf %112, %128 : vector<16x32xf32>
    %cst_38 = arith.constant dense<0.000000e+00> : vector<16xf32>
    %130 = vector.multi_reduction <add>, %129, %cst_38 [1] : vector<16x32xf32> to vector<16xf32>
    %131 = vector.shape_cast %130 : vector<16xf32> to vector<16x1xf32>
    %cst_39 = arith.constant 3.200000e+01 : f32
    %132 = vector.broadcast %cst_39 : f32 to vector<16x1xf32>
    %133 = arith.divf %131, %132 : vector<16x1xf32>
    %134 = vector.broadcast %133 : vector<16x1xf32> to vector<16x32xf32>
    %135 = arith.subf %129, %134 : vector<16x32xf32>
    %136 = arith.mulf %135, %135 : vector<16x32xf32>
    %cst_40 = arith.constant dense<0.000000e+00> : vector<16xf32>
    %137 = vector.multi_reduction <add>, %136, %cst_40 [1] : vector<16x32xf32> to vector<16xf32>
    %138 = vector.shape_cast %137 : vector<16xf32> to vector<16x1xf32>
    %cst_41 = arith.constant 3.200000e+01 : f32
    %139 = vector.broadcast %cst_41 : f32 to vector<16x1xf32>
    %140 = arith.divf %138, %139 : vector<16x1xf32>
    %141 = vector.broadcast %133 : vector<16x1xf32> to vector<16x32xf32>
    %142 = arith.subf %129, %141 : vector<16x32xf32>
    %cst_42 = arith.constant 9.99999974E-6 : f32
    %143 = vector.broadcast %cst_42 : f32 to vector<16x1xf32>
    %144 = arith.addf %140, %143 : vector<16x1xf32>
    %145 = math.rsqrt %144 : vector<16x1xf32>
    %146 = vector.broadcast %145 : vector<16x1xf32> to vector<16x32xf32>
    %147 = arith.mulf %142, %146 : vector<16x32xf32>
    %148 = vector.broadcast %84 : vector<1x32xf32> to vector<16x32xf32>
    %149 = arith.mulf %147, %148 : vector<16x32xf32>
    %150 = vector.broadcast %85 : vector<1x32xf32> to vector<16x32xf32>
    %151 = arith.addf %149, %150 : vector<16x32xf32>
    %c0_43 = arith.constant 0 : index
    %c0_44 = arith.constant 0 : index
    %152 = vector.load %arg5[%c0_43, %c0_44] : memref<16x32xf32, #tpu.memory_space<vmem>>, vector<16x32xf32>
    tpu.vector_store %arg5[%c0_43, %c0_44], %151 {strides = array<i32>} : memref<16x32xf32, #tpu.memory_space<vmem>>, vector<16x32xf32>,
    return
  }
  func.func @transform_0(%arg0: i32) -> (i32, i32) {
    %c0_i32 = arith.constant 0 : i32
    %c0_i32_0 = arith.constant 0 : i32
    return %arg0, %c0_i32 : i32, i32
  }
  func.func @transform_1(%arg0: i32) -> (i32, i32) {
    %c0_i32 = arith.constant 0 : i32
    %c0_i32_0 = arith.constant 0 : i32
    %c0_i32_1 = arith.constant 0 : i32
    return %c0_i32, %c0_i32_0 : i32, i32
  }
  func.func @transform_2(%arg0: i32) -> (i32, i32, i32) {
    %c0_i32 = arith.constant 0 : i32
    %c0_i32_0 = arith.constant 0 : i32
    %c0_i32_1 = arith.constant 0 : i32
    %c0_i32_2 = arith.constant 0 : i32
    return %c0_i32, %c0_i32_0, %c0_i32_1 : i32, i32, i32
  }
  func.func @transform_3(%arg0: i32) -> (i32, i32, i32) {
    %c0_i32 = arith.constant 0 : i32
    %c0_i32_0 = arith.constant 0 : i32
    %c0_i32_1 = arith.constant 0 : i32
    %c0_i32_2 = arith.constant 0 : i32
    return %c0_i32, %c0_i32_0, %c0_i32_1 : i32, i32, i32
  }
  func.func @transform_4(%arg0: i32) -> (i32, i32) {
    %c0_i32 = arith.constant 0 : i32
    %c0_i32_0 = arith.constant 0 : i32
    return %arg0, %c0_i32 : i32, i32
  }
}

</mosaic_0001>

<llo_original>
// kernel: time_series_transformer.1
$region0: #{time_series_transformer.1}
  #allocation0 [shape = 'u32[]', space=smem, size = 0x4, offset = 0x4, fixed_abs, tag = 'smem constant byte address 0x4 - core index']
  #allocation1 [shape = 'u32[144,128]{1,0:T(1,128)}', space=vmem, size = 0x12000, scoped, tag = 'internal scratch']
  %s0 = inlined_call_operand.vmem [shape: f32[16,16], index: 0, kind: input, shape index: {}]
  %s1 = inlined_call_operand.vmem [shape: f32[93,32], index: 1, kind: input, shape index: {}]
  %s2 = inlined_call_operand.vmem [shape: f32[2,1,2048], index: 2, kind: input, shape index: {}]
  %s3 = inlined_call_operand.hbm [shape: bf16[4,32,2048], index: 3, kind: input, shape index: {}]
  %s4 = inlined_call_operand.hbm [shape: f32[16,32], index: 4, kind: output, shape index: {}]
  %s5 = sld [smem:[#allocation0]]
  $region30: #{time_series_transformer.1} parent=0
    _
  %s7 = ssub.s32 1, %s5
  %s8 = scalar_select 0, %s7, %s5
  $region1: #{time_series_transformer.1} parent=0
    #allocation2 [shape = 'u8[524288]{0}', space=vmem, size = 0x80000, scoped, tag = 'input window, operand 3, single buffered']
    #allocation3 [shape = 's32[1]{0}', space=sflag, size = 0x4, scoped, tag = 'scoped memory for time_series_transformer.1']
    #allocation4 [shape = 's32[1]{0}', space=sflag, size = 0x4, scoped, tag = 'scoped memory for time_series_transformer.1']
    #allocation5 [shape = 'u8[8192]{0}', space=vmem, size = 0x2000, scoped, tag = 'output window, operand 0, single buffered']
    %9 = vsyncpa [#allocation3], 0
    %10 = vsyncpa [#allocation4], 0
    // Predicated region
    $region2: #{time_series_transformer.1} parent=1 // pred_check
      _
    $region3: #{time_series_transformer.1} parent=1 // pred_check_branch
      %12 = sbr.rel (0) target = $region5
    $region4: #{time_series_transformer.1} parent=1 // pred_region
      _
    $region5: #{time_series_transformer.1} parent=1 // pred_fallthru
      _
    // Predicated region
    $region6: #{time_series_transformer.1} parent=1 // pred_check
      _
    $region7: #{time_series_transformer.1} parent=1 // pred_check_branch
      %14 = sbr.rel (0) target = $region9
    $region8: #{time_series_transformer.1} parent=1 // pred_region
      _
    $region9: #{time_series_transformer.1} parent=1 // pred_fallthru
      _
    // Predicated region
    $region10: #{time_series_transformer.1} parent=1 // pred_check
      _
    $region11: #{time_series_transformer.1} parent=1 // pred_check_branch
      %16 = sbr.rel (0) target = $region13
    $region12: #{time_series_transformer.1} parent=1 // pred_region
      _
    $region13: #{time_series_transformer.1} parent=1 // pred_fallthru
      _
    // Predicated region
    $region14: #{time_series_transformer.1} parent=1 // pred_check
      _
    $region15: #{time_series_transformer.1} parent=1 // pred_check_branch
      %18 = sbr.rel (0) target = $region17
    $region16: #{time_series_transformer.1} parent=1 // pred_region
      %s20 = ssub.s32 16384, 16384
      %21 = vsyncadd [#allocation3], %s20
      %s22 = sshll.u32 [#allocation2], 4
      %s23 = int_to_ptr.vmem [resolvable:$true] %s22
      %28 = dma.hbm_to_vmem [thread:$0]  %s3, 16384, %s23, [#allocation3], 1024, 1024, 64
    $region17: #{time_series_transformer.1} parent=1 // pred_fallthru
      _
    // Predicated region
    $region18: #{time_series_transformer.1} parent=1 // pred_check
      _
    $region19: #{time_series_transformer.1} parent=1 // pred_check_branch
      %30 = sbr.rel (0) target = $region21
    $region20: #{time_series_transformer.1} parent=1 // pred_region
      %31 = dma.done [#allocation3], 16384
    $region21: #{time_series_transformer.1} parent=1 // pred_fallthru
      _
    %v33 = vld [vmem:[%s0] sm:$0xff]
    %v34 = vld [vmem:[%s0 + $0x8] sm:$0xff]
    %v35 = vld [vmem:[%s1] sm:$0xff]
    %v36 = vld [vmem:[%s1 + $0x8] sm:$0xff]
    %v37 = vld [vmem:[%s1 + $0x10] sm:$0xff]
    %v38 = vld [vmem:[%s1 + $0x18] sm:$0xff]
    %v39 = vld [vmem:[%s1 + $0x20] sm:$0xff]
    %v40 = vld [vmem:[%s1 + $0x28] sm:$0xff]
    %v41 = vld [vmem:[%s1 + $0x30] sm:$0xff]
    %v42 = vld [vmem:[%s1 + $0x38] sm:$0xff]
    %v43 = vld [vmem:[%s1 + $0x40] sm:$0xff]
    %v44 = vld [vmem:[%s1 + $0x48] sm:$0xff]
    %v45 = vld [vmem:[%s1 + $0x50] sm:$0xff]
    %v46 = vld [vmem:[%s1 + $0x58] sm:$0x1f]
    %v47 = vld [vmem:[%s2] sm:$0xff]
    %v48 = vld [vmem:[%s2 + $0x8] sm:$0xff]
    %v49 = vld [vmem:[%s2 + $0x10] sm:$0xff]
    %v50 = vld [vmem:[%s2 + $0x18] sm:$0xff]
    %v51 = vlaneseq
    %v52 = vshrl.u32 %v51, 7
    %v53 = vsub.s32 0, %v52
    %v54 = vrot.slane %v37, %v53
    %vm55 = vcmask 130048
    %v57 = vsel %vm55, %v33, 0
    %v60 = vsel %vm55, %v34, 0
    %62 = vmatprep.subr.mxu0 0.0
    %63 = vmatpush1.msra.mxu0 %v35
    %64 = vmatprep.subr.mxu0 0.0
    %65 = vmatpush1.msra.mxu0 %v36
    %66 = vmatprep.subr.mxu0 0.0
    %67 = vmatpush1.msra.mxu0 0.0
    %68 = vmatprep.subr.mxu0 0.0
    %69 = vmatpush1.msra.mxu0 0.0
    %70 = vmatprep.subr.mxu0 0.0
    %71 = vmatpush1.msra.mxu0 0.0
    %72 = vmatprep.subr.mxu0 0.0
    %73 = vmatpush1.msra.mxu0 0.0
    %74 = vmatprep.subr.mxu0 0.0
    %75 = vmatpush1.msra.mxu0 0.0
    %76 = vmatprep.subr.mxu0 0.0
    %77 = vmatpush1.msra.mxu0 0.0
    %78 = vmatprep.subr.mxu0 0.0
    %79 = vmatpush1.msra.mxu0 0.0
    %80 = vmatprep.subr.mxu0 0.0
    %81 = vmatpush1.msra.mxu0 0.0
    %82 = vmatprep.subr.mxu0 0.0
    %83 = vmatpush1.msra.mxu0 0.0
    %84 = vmatprep.subr.mxu0 0.0
    %85 = vmatpush1.msra.mxu0 0.0
    %86 = vmatprep.subr.mxu0 0.0
    %87 = vmatpush1.msra.mxu0 0.0
    %88 = vmatprep.subr.mxu0 0.0
    %89 = vmatpush1.msra.mxu0 0.0
    %90 = vmatprep.subr.mxu0 0.0
    %91 = vmatpush1.msra.mxu0 0.0
    %92 = vmatprep.subr.mxu0 0.0
    %93 = vmatpush1.msra.mxu0 0.0
    %94 = vmatprep.subr.mxu0 0.0
    %95 = vmatpush1.msra.mxu0 0.0
    %96 = vmatprep.subr.mxu0 0.0
    %97 = vmatpush1.msra.mxu0 0.0
    %98 = vmatprep.subr.mxu0 0.0
    %99 = vmatpush1.msra.mxu0 0.0
    %100 = vmatprep.subr.mxu0 0.0
    %101 = vmatpush1.msra.mxu0 0.0
    %102 = vmatprep.subr.mxu0 0.0
    %103 = vmatpush1.msra.mxu0 0.0
    %104 = vmatprep.subr.mxu0 0.0
    %105 = vmatpush1.msra.mxu0 0.0
    %106 = vmatprep.subr.mxu0 0.0
    %107 = vmatpush1.msra.mxu0 0.0
    %108 = vmatprep.subr.mxu0 0.0
    %109 = vmatpush1.msra.mxu0 0.0
    %110 = vmatprep.subr.mxu0 0.0
    %111 = vmatpush1.msra.mxu0 0.0
    %112 = vmatprep.subr.mxu0 0.0
    %113 = vmatpush1.msra.mxu0 0.0
    %114 = vmatprep.subr.mxu0 0.0
    %115 = vmatpush1.msra.mxu0 0.0
    %116 = vmatprep.subr.mxu0 0.0
    %117 = vmatpush1.msra.mxu0 0.0
    %118 = vmatprep.subr.mxu0 0.0
    %119 = vmatpush1.msra.mxu0 0.0
    %120 = vmatprep.subr.mxu0 0.0
    %121 = vmatpush1.msra.mxu0 0.0
    %122 = vmatprep.subr.mxu0 0.0
    %123 = vmatpush1.msra.mxu0 0.0
    %124 = vmatprep.subr.mxu0 0.0
    %125 = vmatpush1.msra.mxu0 0.0
    %126 = vmatprep.mubr.f32.mxu0 0.0
    %127 = vmatmul.mubr.f32.gmra.mrb[0].mxu0 %v57
    %v128 = vpop.f32.mrb[0].mxu0
    %v129 = vadd.f32 %v54, %v128
    %v130 = vpop.f32.mrb[0].mxu0
    %131 = vmatprep.mubr.f32.mxu0 0.0
    %132 = vmatmul.mubr.f32.gmra.mrb[0].mxu0 %v60
    %v133 = vpop.f32.mrb[0].mxu0
    %v134 = vadd.f32 %v54, %v133
    %v135 = vpop.f32.mrb[0].mxu0
    %136 = vdwg.mxu0
    %v137 = vlaneseq
    %v138 = vshrl.u32 %v137, 7
    %v139 = vsub.s32 1, %v138
    %v140 = vrot.slane %v41, %v139
    %vm146 = vcmask 1046528
    %v147 = vrot.slane %v37, 1
    %v148 = vrot.slane %v38, 1
    %v149 = vsel %vm146, %v147, %v148
    %v150 = vrot.slane %v39, 1
    %v151 = vsel %vm146, %v148, %v150
    %v152 = vrot.slane %v40, 1
    %v153 = vsel %vm146, %v150, %v152
    %v154 = vrot.slane %v41, 1
    %v155 = vsel %vm146, %v152, %v154
    %vm160 = vcmask 261120
    %v162 = vsel %vm160, %v129, 0
    %v165 = vsel %vm160, %v134, 0
    %167 = vmatprep.subr.mxu0 0.0
    %168 = vmatpush1.msra.mxu0 %v149
    %169 = vmatprep.subr.mxu0 0.0
    %170 = vmatpush1.msra.mxu0 %v151
    %171 = vmatprep.subr.mxu0 0.0
    %172 = vmatpush1.msra.mxu0 %v153
    %173 = vmatprep.subr.mxu0 0.0
    %174 = vmatpush1.msra.mxu0 %v155
    %175 = vmatprep.subr.mxu0 0.0
    %176 = vmatpush1.msra.mxu0 0.0
    %177 = vmatprep.subr.mxu0 0.0
    %178 = vmatpush1.msra.mxu0 0.0
    %179 = vmatprep.subr.mxu0 0.0
    %180 = vmatpush1.msra.mxu0 0.0
    %181 = vmatprep.subr.mxu0 0.0
    %182 = vmatpush1.msra.mxu0 0.0
    %183 = vmatprep.subr.mxu0 0.0
    %184 = vmatpush1.msra.mxu0 0.0
    %185 = vmatprep.subr.mxu0 0.0
    %186 = vmatpush1.msra.mxu0 0.0
    %187 = vmatprep.subr.mxu0 0.0
    %188 = vmatpush1.msra.mxu0 0.0
    %189 = vmatprep.subr.mxu0 0.0
    %190 = vmatpush1.msra.mxu0 0.0
    %191 = vmatprep.subr.mxu0 0.0
    %192 = vmatpush1.msra.mxu0 0.0
    %193 = vmatprep.subr.mxu0 0.0
    %194 = vmatpush1.msra.mxu0 0.0
    %195 = vmatprep.subr.mxu0 0.0
    %196 = vmatpush1.msra.mxu0 0.0
    %197 = vmatprep.subr.mxu0 0.0
    %198 = vmatpush1.msra.mxu0 0.0
    %199 = vmatprep.subr.mxu0 0.0
    %200 = vmatpush1.msra.mxu0 0.0
    %201 = vmatprep.subr.mxu0 0.0
    %202 = vmatpush1.msra.mxu0 0.0
    %203 = vmatprep.subr.mxu0 0.0
    %204 = vmatpush1.msra.mxu0 0.0
    %205 = vmatprep.subr.mxu0 0.0
    %206 = vmatpush1.msra.mxu0 0.0
    %207 = vmatprep.subr.mxu0 0.0
    %208 = vmatpush1.msra.mxu0 0.0
    %209 = vmatprep.subr.mxu0 0.0
    %210 = vmatpush1.msra.mxu0 0.0
    %211 = vmatprep.subr.mxu0 0.0
    %212 = vmatpush1.msra.mxu0 0.0
    %213 = vmatprep.subr.mxu0 0.0
    %214 = vmatpush1.msra.mxu0 0.0
    %215 = vmatprep.subr.mxu0 0.0
    %216 = vmatpush1.msra.mxu0 0.0
    %217 = vmatprep.subr.mxu0 0.0
    %218 = vmatpush1.msra.mxu0 0.0
    %219 = vmatprep.subr.mxu0 0.0
    %220 = vmatpush1.msra.mxu0 0.0
    %221 = vmatprep.subr.mxu0 0.0
    %222 = vmatpush1.msra.mxu0 0.0
    %223 = vmatprep.subr.mxu0 0.0
    %224 = vmatpush1.msra.mxu0 0.0
    %225 = vmatprep.subr.mxu0 0.0
    %226 = vmatpush1.msra.mxu0 0.0
    %227 = vmatprep.subr.mxu0 0.0
    %228 = vmatpush1.msra.mxu0 0.0
    %229 = vmatprep.subr.mxu0 0.0
    %230 = vmatpush1.msra.mxu0 0.0
    %231 = vmatprep.mubr.f32.mxu0 0.0
    %232 = vmatmul.mubr.f32.gmra.mrb[0].mxu0 %v162
    %v233 = vpop.f32.mrb[0].mxu0
    %v234 = vadd.f32 %v140, %v233
    %v235 = vpop.f32.mrb[0].mxu0
    %236 = vmatprep.mubr.f32.mxu0 0.0
    %237 = vmatmul.mubr.f32.gmra.mrb[0].mxu0 %v165
    %v238 = vpop.f32.mrb[0].mxu0
    %v239 = vadd.f32 %v140, %v238
    %v240 = vpop.f32.mrb[0].mxu0
    %241 = vdwg.mxu0
    %v242 = vadd.f32 %v129, %v234
    %v243 = vadd.f32 %v134, %v239
    %v244 = vsel %vm160, %v242, 0.0
    %245 = vadd.xlane.f32.xlu0 %v244
    %v246 = vpop.xlane.xlu0 %245
    %v247 = vsel %vm160, %v243, 0.0
    %248 = vadd.xlane.f32.xlu0 %v247
    %v249 = vpop.xlane.xlu0 %248
    %v250 = vrcp.pop 32.0
    %v251 = vmul.f32 %v246, %v250
    %v252 = vmul.f32 %v249, %v250
    %v253 = vsub.f32 %v242, %v251
    %v254 = vsub.f32 %v243, %v252
    %v255 = vmul.f32 %v253, %v253
    %v256 = vmul.f32 %v254, %v254
    %v257 = vsel %vm160, %v255, 0.0
    %258 = vadd.xlane.f32.xlu0 %v257
    %v259 = vpop.xlane.xlu0 %258
    %v260 = vsel %vm160, %v256, 0.0
    %261 = vadd.xlane.f32.xlu0 %v260
    %v262 = vpop.xlane.xlu0 %261
    %v263 = vmul.f32 %v259, %v250
    %v264 = vmul.f32 %v262, %v250
    %v265 = vadd.f32 %v263, 1e-05
    %v266 = vadd.f32 %v264, 1e-05
    %v267 = vrsqrt.pop %v265
    %v268 = vrsqrt.pop %v266
    %v269 = vmul.f32 %v253, %v267
    %v270 = vmul.f32 %v254, %v268
    %v271 = vlaneseq
    %v272 = vshrl.u32 %v271, 7
    %v273 = vsub.s32 2, %v272
    %v274 = vrot.slane %v41, %v273
    %v275 = vmul.f32 %v269, %v274
    %v276 = vmul.f32 %v270, %v274
    %v277 = vlaneseq
    %v278 = vshrl.u32 %v277, 7
    %v279 = vsub.s32 3, %v278
    %v280 = vrot.slane %v41, %v279
    %v281 = vadd.f32 %v275, %v280
    %v282 = vadd.f32 %v276, %v280
    %v283 = vld [vmem:[#allocation2] sm:$0xff]
    %v284 = vld [vmem:[#allocation2 + $0x8] sm:$0xff]
    %v285 = vld [vmem:[#allocation2 + $0x10] sm:$0xff]
    %v286 = vld [vmem:[#allocation2 + $0x18] sm:$0xff]
    %v287 = vld [vmem:[#allocation2 + $0x20] sm:$0xff]
    %v288 = vld [vmem:[#allocation2 + $0x28] sm:$0xff]
    %v289 = vld [vmem:[#allocation2 + $0x30] sm:$0xff]
    %v290 = vld [vmem:[#allocation2 + $0x38] sm:$0xff]
    %v291 = vld [vmem:[#allocation2 + $0x40] sm:$0xff]
    %v292 = vld [vmem:[#allocation2 + $0x48] sm:$0xff]
    %v293 = vld [vmem:[#allocation2 + $0x50] sm:$0xff]
    %v294 = vld [vmem:[#allocation2 + $0x58] sm:$0xff]
    %v295 = vld [vmem:[#allocation2 + $0x60] sm:$0xff]
    %v296 = vld [vmem:[#allocation2 + $0x68] sm:$0xff]
    %v297 = vld [vmem:[#allocation2 + $0x70] sm:$0xff]
    %v298 = vld [vmem:[#allocation2 + $0x78] sm:$0xff]
    %v299 = vld [vmem:[#allocation2 + $0x80] sm:$0xff]
    %v300 = vld [vmem:[#allocation2 + $0x88] sm:$0xff]
    %v301 = vld [vmem:[#allocation2 + $0x90] sm:$0xff]
    %v302 = vld [vmem:[#allocation2 + $0x98] sm:$0xff]
    %v303 = vld [vmem:[#allocation2 + $0xa0] sm:$0xff]
    %v304 = vld [vmem:[#allocation2 + $0xa8] sm:$0xff]
    %v305 = vld [vmem:[#allocation2 + $0xb0] sm:$0xff]
    %v306 = vld [vmem:[#allocation2 + $0xb8] sm:$0xff]
    %v307 = vld [vmem:[#allocation2 + $0xc0] sm:$0xff]
    %v308 = vld [vmem:[#allocation2 + $0xc8] sm:$0xff]
    %v309 = vld [vmem:[#allocation2 + $0xd0] sm:$0xff]
    %v310 = vld [vmem:[#allocation2 + $0xd8] sm:$0xff]
    %v311 = vld [vmem:[#allocation2 + $0xe0] sm:$0xff]
    %v312 = vld [vmem:[#allocation2 + $0xe8] sm:$0xff]
    %v313 = vld [vmem:[#allocation2 + $0xf0] sm:$0xff]
    %v314 = vld [vmem:[#allocation2 + $0xf8] sm:$0xff]
    %s315 = scalar_lea.vmem [#allocation2], 256
    %v316 = vld [vmem:[%s315] sm:$0xff]
    %v317 = vld [vmem:[%s315 + $0x8] sm:$0xff]
    %v318 = vld [vmem:[%s315 + $0x10] sm:$0xff]
    %v319 = vld [vmem:[%s315 + $0x18] sm:$0xff]
    %v320 = vld [vmem:[%s315 + $0x20] sm:$0xff]
    %v321 = vld [vmem:[%s315 + $0x28] sm:$0xff]
    %v322 = vld [vmem:[%s315 + $0x30] sm:$0xff]
    %v323 = vld [vmem:[%s315 + $0x38] sm:$0xff]
    %v324 = vld [vmem:[%s315 + $0x40] sm:$0xff]
    %v325 = vld [vmem:[%s315 + $0x48] sm:$0xff]
    %v326 = vld [vmem:[%s315 + $0x50] sm:$0xff]
    %v327 = vld [vmem:[%s315 + $0x58] sm:$0xff]
    %v328 = vld [vmem:[%s315 + $0x60] sm:$0xff]
    %v329 = vld [vmem:[%s315 + $0x68] sm:$0xff]
    %v330 = vld [vmem:[%s315 + $0x70] sm:$0xff]
    %v331 = vld [vmem:[%s315 + $0x78] sm:$0xff]
    %v332 = vld [vmem:[%s315 + $0x80] sm:$0xff]
    %v333 = vld [vmem:[%s315 + $0x88] sm:$0xff]
    %v334 = vld [vmem:[%s315 + $0x90] sm:$0xff]
    %v335 = vld [vmem:[%s315 + $0x98] sm:$0xff]
    %v336 = vld [vmem:[%s315 + $0xa0] sm:$0xff]
    %v337 = vld [vmem:[%s315 + $0xa8] sm:$0xff]
    %v338 = vld [vmem:[%s315 + $0xb0] sm:$0xff]
    %v339 = vld [vmem:[%s315 + $0xb8] sm:$0xff]
    %v340 = vld [vmem:[%s315 + $0xc0] sm:$0xff]
    %v341 = vld [vmem:[%s315 + $0xc8] sm:$0xff]
    %v342 = vld [vmem:[%s315 + $0xd0] sm:$0xff]
    %v343 = vld [vmem:[%s315 + $0xd8] sm:$0xff]
    %v344 = vld [vmem:[%s315 + $0xe0] sm:$0xff]
    %v345 = vld [vmem:[%s315 + $0xe8] sm:$0xff]
    %v346 = vld [vmem:[%s315 + $0xf0] sm:$0xff]
    %v347 = vld [vmem:[%s315 + $0xf8] sm:$0xff]
    %v348 = vpack.c.bf16 %v282, %v281
    %v351 = vlaneseq
    %v352 = vshrl.u32 %v351, 7
    %v353 = vsub.s32 0, %v352
    %v354 = vrot.slane %v47, %v353
    %v355 = vlaneseq
    %v356 = vshrl.u32 %v355, 7
    %v357 = vsub.s32 1, %v356
    %v358 = vrot.slane %v47, %v357
    %v359 = vlaneseq
    %v360 = vshrl.u32 %v359, 7
    %v361 = vsub.s32 2, %v360
    %v362 = vrot.slane %v47, %v361
    %v363 = vlaneseq
    %v364 = vshrl.u32 %v363, 7
    %v365 = vsub.s32 3, %v364
    %v366 = vrot.slane %v47, %v365
    %v367 = vlaneseq
    %v368 = vshrl.u32 %v367, 7
    %v369 = vsub.s32 4, %v368
    %v370 = vrot.slane %v47, %v369
    %v371 = vlaneseq
    %v372 = vshrl.u32 %v371, 7
    %v373 = vsub.s32 5, %v372
    %v374 = vrot.slane %v47, %v373
    %v375 = vlaneseq
    %v376 = vshrl.u32 %v375, 7
    %v377 = vsub.s32 6, %v376
    %v378 = vrot.slane %v47, %v377
    %v379 = vlaneseq
    %v380 = vshrl.u32 %v379, 7
    %v381 = vsub.s32 7, %v380
    %v382 = vrot.slane %v47, %v381
    %v383 = vlaneseq
    %v384 = vshrl.u32 %v383, 7
    %v385 = vsub.s32 0, %v384
    %v386 = vrot.slane %v48, %v385
    %v387 = vlaneseq
    %v388 = vshrl.u32 %v387, 7
    %v389 = vsub.s32 1, %v388
    %v390 = vrot.slane %v48, %v389
    %v391 = vlaneseq
    %v392 = vshrl.u32 %v391, 7
    %v393 = vsub.s32 2, %v392
    %v394 = vrot.slane %v48, %v393
    %v395 = vlaneseq
    %v396 = vshrl.u32 %v395, 7
    %v397 = vsub.s32 3, %v396
    %v398 = vrot.slane %v48, %v397
    %v399 = vlaneseq
    %v400 = vshrl.u32 %v399, 7
    %v401 = vsub.s32 4, %v400
    %v402 = vrot.slane %v48, %v401
    %v403 = vlaneseq
    %v404 = vshrl.u32 %v403, 7
    %v405 = vsub.s32 5, %v404
    %v406 = vrot.slane %v48, %v405
    %v407 = vlaneseq
    %v408 = vshrl.u32 %v407, 7
    %v409 = vsub.s32 6, %v408
    %v410 = vrot.slane %v48, %v409
    %v411 = vlaneseq
    %v412 = vshrl.u32 %v411, 7
    %v413 = vsub.s32 7, %v412
    %v414 = vrot.slane %v48, %v413
    %v463 = vunpack.c.l.b16 %v283
    %v464 = vunpack.c.h.b16 %v283
    %v465 = vunpack.c.l.b16 %v284
    %v466 = vunpack.c.h.b16 %v284
    %v467 = vunpack.c.l.b16 %v285
    %v468 = vunpack.c.h.b16 %v285
    %v469 = vunpack.c.l.b16 %v286
    %v470 = vunpack.c.h.b16 %v286
    %v471 = vunpack.c.l.b16 %v287
    %v472 = vunpack.c.h.b16 %v287
    %v473 = vunpack.c.l.b16 %v288
    %v474 = vunpack.c.h.b16 %v288
    %v475 = vunpack.c.l.b16 %v289
    %v476 = vunpack.c.h.b16 %v289
    %v477 = vunpack.c.l.b16 %v290
    %v478 = vunpack.c.h.b16 %v290
    %v479 = vunpack.c.l.b16 %v291
    %v480 = vunpack.c.h.b16 %v291
    %v481 = vunpack.c.l.b16 %v292
    %v482 = vunpack.c.h.b16 %v292
    %v483 = vunpack.c.l.b16 %v293
    %v484 = vunpack.c.h.b16 %v293
    %v485 = vunpack.c.l.b16 %v294
    %v486 = vunpack.c.h.b16 %v294
    %v487 = vunpack.c.l.b16 %v295
    %v488 = vunpack.c.h.b16 %v295
    %v489 = vunpack.c.l.b16 %v296
    %v490 = vunpack.c.h.b16 %v296
    %v491 = vunpack.c.l.b16 %v297
    %v492 = vunpack.c.h.b16 %v297
    %v493 = vunpack.c.l.b16 %v298
    %v494 = vunpack.c.h.b16 %v298
    %v495 = vunpack.c.l.b16 %v299
    %v496 = vunpack.c.h.b16 %v299
    %v497 = vunpack.c.l.b16 %v300
    %v498 = vunpack.c.h.b16 %v300
    %v499 = vunpack.c.l.b16 %v301
    %v500 = vunpack.c.h.b16 %v301
    %v501 = vunpack.c.l.b16 %v302
    %v502 = vunpack.c.h.b16 %v302
    %v503 = vunpack.c.l.b16 %v303
    %v504 = vunpack.c.h.b16 %v303
    %v505 = vunpack.c.l.b16 %v304
    %v506 = vunpack.c.h.b16 %v304
    %v507 = vunpack.c.l.b16 %v305
    %v508 = vunpack.c.h.b16 %v305
    %v509 = vunpack.c.l.b16 %v306
    %v510 = vunpack.c.h.b16 %v306
    %v511 = vunpack.c.l.b16 %v307
    %v512 = vunpack.c.h.b16 %v307
    %v513 = vunpack.c.l.b16 %v308
    %v514 = vunpack.c.h.b16 %v308
    %v515 = vunpack.c.l.b16 %v309
    %v516 = vunpack.c.h.b16 %v309
    %v517 = vunpack.c.l.b16 %v310
    %v518 = vunpack.c.h.b16 %v310
    %v519 = vunpack.c.l.b16 %v311
    %v520 = vunpack.c.h.b16 %v311
    %v521 = vunpack.c.l.b16 %v312
    %v522 = vunpack.c.h.b16 %v312
    %v523 = vunpack.c.l.b16 %v313
    %v524 = vunpack.c.h.b16 %v313
    %v525 = vunpack.c.l.b16 %v314
    %v526 = vunpack.c.h.b16 %v314
    %v527 = vpack.c.b16 %v479, %v463
    %v528 = vpack.c.b16 %v480, %v464
    %v529 = vpack.c.b16 %v481, %v465
    %v530 = vpack.c.b16 %v482, %v466
    %v531 = vpack.c.b16 %v483, %v467
    %v532 = vpack.c.b16 %v484, %v468
    %v533 = vpack.c.b16 %v485, %v469
    %v534 = vpack.c.b16 %v486, %v470
    %v535 = vpack.c.b16 %v487, %v471
    %v536 = vpack.c.b16 %v488, %v472
    %v537 = vpack.c.b16 %v489, %v473
    %v538 = vpack.c.b16 %v490, %v474
    %v539 = vpack.c.b16 %v491, %v475
    %v540 = vpack.c.b16 %v492, %v476
    %v541 = vpack.c.b16 %v493, %v477
    %v542 = vpack.c.b16 %v494, %v478
    %v543 = vpack.c.b16 %v511, %v495
    %v544 = vpack.c.b16 %v512, %v496
    %v545 = vpack.c.b16 %v513, %v497
    %v546 = vpack.c.b16 %v514, %v498
    %v547 = vpack.c.b16 %v515, %v499
    %v548 = vpack.c.b16 %v516, %v500
    %v549 = vpack.c.b16 %v517, %v501
    %v550 = vpack.c.b16 %v518, %v502
    %v551 = vpack.c.b16 %v519, %v503
    %v552 = vpack.c.b16 %v520, %v504
    %v553 = vpack.c.b16 %v521, %v505
    %v554 = vpack.c.b16 %v522, %v506
    %v555 = vpack.c.b16 %v523, %v507
    %v556 = vpack.c.b16 %v524, %v508
    %v557 = vpack.c.b16 %v525, %v509
    %v558 = vpack.c.b16 %v526, %v510
    %v592 = vsel %vm160, %v348, 0
    %594 = vmatprep.subr.bf16.mxu0 %v528
    %595 = vmatpush1.bf16.msra.mxu0 %v527
    %596 = vmatprep.subr.bf16.mxu0 %v544
    %597 = vmatpush1.bf16.msra.mxu0 %v543
    %598 = vmatprep.subr.bf16.mxu0 0
    %599 = vmatpush1.bf16.msra.mxu0 0
    %600 = vmatprep.subr.bf16.mxu0 0
    %601 = vmatpush1.bf16.msra.mxu0 0
    %602 = vmatprep.subr.bf16.mxu0 0
    %603 = vmatpush1.bf16.msra.mxu0 0
    %604 = vmatprep.subr.bf16.mxu0 0
    %605 = vmatpush1.bf16.msra.mxu0 0
    %606 = vmatprep.subr.bf16.mxu0 0
    %607 = vmatpush1.bf16.msra.mxu0 0
    %608 = vmatprep.subr.bf16.mxu0 0
    %609 = vmatpush1.bf16.msra.mxu0 0
    %610 = vmatprep.subr.bf16.mxu0 0
    %611 = vmatpush1.bf16.msra.mxu0 0
    %612 = vmatprep.subr.bf16.mxu0 0
    %613 = vmatpush1.bf16.msra.mxu0 0
    %614 = vmatprep.subr.bf16.mxu0 0
    %615 = vmatpush1.bf16.msra.mxu0 0
    %616 = vmatprep.subr.bf16.mxu0 0
    %617 = vmatpush1.bf16.msra.mxu0 0
    %618 = vmatprep.subr.bf16.mxu0 0
    %619 = vmatpush1.bf16.msra.mxu0 0
    %620 = vmatprep.subr.bf16.mxu0 0
    %621 = vmatpush1.bf16.msra.mxu0 0
    %622 = vmatprep.subr.bf16.mxu0 0
    %623 = vmatpush1.bf16.msra.mxu0 0
    %624 = vmatprep.subr.bf16.mxu0 0
    %625 = vmatpush1.bf16.msra.mxu0 0
    %626 = vmatprep.mubr.bf16.mxu0 0
    %627 = vmatmul.mubr.bf16.gmra.mrb[0].mxu0 %v592
    %v628 = vpop.f32.mrb[0].mxu0
    %v629 = vadd.f32 %v354, %v628
    %v630 = vpop.f32.mrb[0].mxu0
    %v631 = vadd.f32 %v358, %v630
    %v632 = vpop.f32.mrb[0].mxu0
    %v633 = vadd.f32 %v354, %v632
    %v634 = vpop.f32.mrb[0].mxu0
    %v635 = vadd.f32 %v358, %v634
    %636 = vdwg.mxu0
    %637 = vmatprep.subr.bf16.mxu0 %v530
    %638 = vmatpush1.bf16.msra.mxu0 %v529
    %639 = vmatprep.subr.bf16.mxu0 %v546
    %640 = vmatpush1.bf16.msra.mxu0 %v545
    %641 = vmatprep.subr.bf16.mxu0 0
    %642 = vmatpush1.bf16.msra.mxu0 0
    %643 = vmatprep.subr.bf16.mxu0 0
    %644 = vmatpush1.bf16.msra.mxu0 0
    %645 = vmatprep.subr.bf16.mxu0 0
    %646 = vmatpush1.bf16.msra.mxu0 0
    %647 = vmatprep.subr.bf16.mxu0 0
    %648 = vmatpush1.bf16.msra.mxu0 0
    %649 = vmatprep.subr.bf16.mxu0 0
    %650 = vmatpush1.bf16.msra.mxu0 0
    %651 = vmatprep.subr.bf16.mxu0 0
    %652 = vmatpush1.bf16.msra.mxu0 0
    %653 = vmatprep.subr.bf16.mxu0 0
    %654 = vmatpush1.bf16.msra.mxu0 0
    %655 = vmatprep.subr.bf16.mxu0 0
    %656 = vmatpush1.bf16.msra.mxu0 0
    %657 = vmatprep.subr.bf16.mxu0 0
    %658 = vmatpush1.bf16.msra.mxu0 0
    %659 = vmatprep.subr.bf16.mxu0 0
    %660 = vmatpush1.bf16.msra.mxu0 0
    %661 = vmatprep.subr.bf16.mxu0 0
    %662 = vmatpush1.bf16.msra.mxu0 0
    %663 = vmatprep.subr.bf16.mxu0 0
    %664 = vmatpush1.bf16.msra.mxu0 0
    %665 = vmatprep.subr.bf16.mxu0 0
    %666 = vmatpush1.bf16.msra.mxu0 0
    %667 = vmatprep.subr.bf16.mxu0 0
    %668 = vmatpush1.bf16.msra.mxu0 0
    %669 = vmatprep.mubr.bf16.mxu0 0
    %670 = vmatmul.mubr.bf16.gmra.mrb[0].mxu0 %v592
    %v671 = vpop.f32.mrb[0].mxu0
    %v672 = vadd.f32 %v362, %v671
    %v673 = vpop.f32.mrb[0].mxu0
    %v674 = vadd.f32 %v366, %v673
    %v675 = vpop.f32.mrb[0].mxu0
    %v676 = vadd.f32 %v362, %v675
    %v677 = vpop.f32.mrb[0].mxu0
    %v678 = vadd.f32 %v366, %v677
    %679 = vdwg.mxu0
    %680 = vmatprep.subr.bf16.mxu0 %v532
    %681 = vmatpush1.bf16.msra.mxu0 %v531
    %682 = vmatprep.subr.bf16.mxu0 %v548
    %683 = vmatpush1.bf16.msra.mxu0 %v547
    %684 = vmatprep.subr.bf16.mxu0 0
    %685 = vmatpush1.bf16.msra.mxu0 0
    %686 = vmatprep.subr.bf16.mxu0 0
    %687 = vmatpush1.bf16.msra.mxu0 0
    %688 = vmatprep.subr.bf16.mxu0 0
    %689 = vmatpush1.bf16.msra.mxu0 0
    %690 = vmatprep.subr.bf16.mxu0 0
    %691 = vmatpush1.bf16.msra.mxu0 0
    %692 = vmatprep.subr.bf16.mxu0 0
    %693 = vmatpush1.bf16.msra.mxu0 0
    %694 = vmatprep.subr.bf16.mxu0 0
    %695 = vmatpush1.bf16.msra.mxu0 0
    %696 = vmatprep.subr.bf16.mxu0 0
    %697 = vmatpush1.bf16.msra.mxu0 0
    %698 = vmatprep.subr.bf16.mxu0 0
    %699 = vmatpush1.bf16.msra.mxu0 0
    %700 = vmatprep.subr.bf16.mxu0 0
    %701 = vmatpush1.bf16.msra.mxu0 0
    %702 = vmatprep.subr.bf16.mxu0 0
    %703 = vmatpush1.bf16.msra.mxu0 0
    %704 = vmatprep.subr.bf16.mxu0 0
    %705 = vmatpush1.bf16.msra.mxu0 0
    %706 = vmatprep.subr.bf16.mxu0 0
    %707 = vmatpush1.bf16.msra.mxu0 0
    %708 = vmatprep.subr.bf16.mxu0 0
    %709 = vmatpush1.bf16.msra.mxu0 0
    %710 = vmatprep.subr.bf16.mxu0 0
    %711 = vmatpush1.bf16.msra.mxu0 0
    %712 = vmatprep.mubr.bf16.mxu0 0
    %713 = vmatmul.mubr.bf16.gmra.mrb[0].mxu0 %v592
    %v714 = vpop.f32.mrb[0].mxu0
    %v715 = vadd.f32 %v370, %v714
    %v716 = vpop.f32.mrb[0].mxu0
    %v717 = vadd.f32 %v374, %v716
    %v718 = vpop.f32.mrb[0].mxu0
    %v719 = vadd.f32 %v370, %v718
    %v720 = vpop.f32.mrb[0].mxu0
    %v721 = vadd.f32 %v374, %v720
    %722 = vdwg.mxu0
    %723 = vmatprep.subr.bf16.mxu0 %v534
    %724 = vmatpush1.bf16.msra.mxu0 %v533
    %725 = vmatprep.subr.bf16.mxu0 %v550
    %726 = vmatpush1.bf16.msra.mxu0 %v549
    %727 = vmatprep.subr.bf16.mxu0 0
    %728 = vmatpush1.bf16.msra.mxu0 0
    %729 = vmatprep.subr.bf16.mxu0 0
    %730 = vmatpush1.bf16.msra.mxu0 0
    %731 = vmatprep.subr.bf16.mxu0 0
    %732 = vmatpush1.bf16.msra.mxu0 0
    %733 = vmatprep.subr.bf16.mxu0 0
    %734 = vmatpush1.bf16.msra.mxu0 0
    %735 = vmatprep.subr.bf16.mxu0 0
    %736 = vmatpush1.bf16.msra.mxu0 0
    %737 = vmatprep.subr.bf16.mxu0 0
    %738 = vmatpush1.bf16.msra.mxu0 0
    %739 = vmatprep.subr.bf16.mxu0 0
    %740 = vmatpush1.bf16.msra.mxu0 0
    %741 = vmatprep.subr.bf16.mxu0 0
    %742 = vmatpush1.bf16.msra.mxu0 0
    %743 = vmatprep.subr.bf16.mxu0 0
    %744 = vmatpush1.bf16.msra.mxu0 0
    %745 = vmatprep.subr.bf16.mxu0 0
    %746 = vmatpush1.bf16.msra.mxu0 0
    %747 = vmatprep.subr.bf16.mxu0 0
    %748 = vmatpush1.bf16.msra.mxu0 0
    %749 = vmatprep.subr.bf16.mxu0 0
    %750 = vmatpush1.bf16.msra.mxu0 0
    %751 = vmatprep.subr.bf16.mxu0 0
    %752 = vmatpush1.bf16.msra.mxu0 0
    %753 = vmatprep.subr.bf16.mxu0 0
    %754 = vmatpush1.bf16.msra.mxu0 0
    %755 = vmatprep.mubr.bf16.mxu0 0
    %756 = vmatmul.mubr.bf16.gmra.mrb[0].mxu0 %v592
    %v757 = vpop.f32.mrb[0].mxu0
    %v758 = vadd.f32 %v378, %v757
    %v759 = vpop.f32.mrb[0].mxu0
    %v760 = vadd.f32 %v382, %v759
    %v761 = vpop.f32.mrb[0].mxu0
    %v762 = vadd.f32 %v378, %v761
    %v763 = vpop.f32.mrb[0].mxu0
    %v764 = vadd.f32 %v382, %v763
    %765 = vdwg.mxu0
    %766 = vmatprep.subr.bf16.mxu0 %v536
    %767 = vmatpush1.bf16.msra.mxu0 %v535
    %768 = vmatprep.subr.bf16.mxu0 %v552
    %769 = vmatpush1.bf16.msra.mxu0 %v551
    %770 = vmatprep.subr.bf16.mxu0 0
    %771 = vmatpush1.bf16.msra.mxu0 0
    %772 = vmatprep.subr.bf16.mxu0 0
    %773 = vmatpush1.bf16.msra.mxu0 0
    %774 = vmatprep.subr.bf16.mxu0 0
    %775 = vmatpush1.bf16.msra.mxu0 0
    %776 = vmatprep.subr.bf16.mxu0 0
    %777 = vmatpush1.bf16.msra.mxu0 0
    %778 = vmatprep.subr.bf16.mxu0 0
    %779 = vmatpush1.bf16.msra.mxu0 0
    %780 = vmatprep.subr.bf16.mxu0 0
    %781 = vmatpush1.bf16.msra.mxu0 0
    %782 = vmatprep.subr.bf16.mxu0 0
    %783 = vmatpush1.bf16.msra.mxu0 0
    %784 = vmatprep.subr.bf16.mxu0 0
    %785 = vmatpush1.bf16.msra.mxu0 0
    %786 = vmatprep.subr.bf16.mxu0 0
    %787 = vmatpush1.bf16.msra.mxu0 0
    %788 = vmatprep.subr.bf16.mxu0 0
    %789 = vmatpush1.bf16.msra.mxu0 0
    %790 = vmatprep.subr.bf16.mxu0 0
    %791 = vmatpush1.bf16.msra.mxu0 0
    %792 = vmatprep.subr.bf16.mxu0 0
    %793 = vmatpush1.bf16.msra.mxu0 0
    %794 = vmatprep.subr.bf16.mxu0 0
    %795 = vmatpush1.bf16.msra.mxu0 0
    %796 = vmatprep.subr.bf16.mxu0 0
    %797 = vmatpush1.bf16.msra.mxu0 0
    %798 = vmatprep.mubr.bf16.mxu0 0
    %799 = vmatmul.mubr.bf16.gmra.mrb[0].mxu0 %v592
    %v800 = vpop.f32.mrb[0].mxu0
    %v801 = vadd.f32 %v386, %v800
    %v802 = vpop.f32.mrb[0].mxu0
    %v803 = vadd.f32 %v390, %v802
    %v804 = vpop.f32.mrb[0].mxu0
    %v805 = vadd.f32 %v386, %v804
    %v806 = vpop.f32.mrb[0].mxu0
    %v807 = vadd.f32 %v390, %v806
    %808 = vdwg.mxu0
    %809 = vmatprep.subr.bf16.mxu0 %v538
    %810 = vmatpush1.bf16.msra.mxu0 %v537
    %811 = vmatprep.subr.bf16.mxu0 %v554
    %812 = vmatpush1.bf16.msra.mxu0 %v553
    %813 = vmatprep.subr.bf16.mxu0 0
    %814 = vmatpush1.bf16.msra.mxu0 0
    %815 = vmatprep.subr.bf16.mxu0 0
    %816 = vmatpush1.bf16.msra.mxu0 0
    %817 = vmatprep.subr.bf16.mxu0 0
    %818 = vmatpush1.bf16.msra.mxu0 0
    %819 = vmatprep.subr.bf16.mxu0 0
    %820 = vmatpush1.bf16.msra.mxu0 0
    %821 = vmatprep.subr.bf16.mxu0 0
    %822 = vmatpush1.bf16.msra.mxu0 0
    %823 = vmatprep.subr.bf16.mxu0 0
    %824 = vmatpush1.bf16.msra.mxu0 0
    %825 = vmatprep.subr.bf16.mxu0 0
    %826 = vmatpush1.bf16.msra.mxu0 0
    %827 = vmatprep.subr.bf16.mxu0 0
    %828 = vmatpush1.bf16.msra.mxu0 0
    %829 = vmatprep.subr.bf16.mxu0 0
    %830 = vmatpush1.bf16.msra.mxu0 0
    %831 = vmatprep.subr.bf16.mxu0 0
    %832 = vmatpush1.bf16.msra.mxu0 0
    %833 = vmatprep.subr.bf16.mxu0 0
    %834 = vmatpush1.bf16.msra.mxu0 0
    %835 = vmatprep.subr.bf16.mxu0 0
    %836 = vmatpush1.bf16.msra.mxu0 0
    %837 = vmatprep.subr.bf16.mxu0 0
    %838 = vmatpush1.bf16.msra.mxu0 0
    %839 = vmatprep.subr.bf16.mxu0 0
    %840 = vmatpush1.bf16.msra.mxu0 0
    %841 = vmatprep.mubr.bf16.mxu0 0
    %842 = vmatmul.mubr.bf16.gmra.mrb[0].mxu0 %v592
    %v843 = vpop.f32.mrb[0].mxu0
    %v844 = vadd.f32 %v394, %v843
    %v845 = vpop.f32.mrb[0].mxu0
    %v846 = vadd.f32 %v398, %v845
    %v847 = vpop.f32.mrb[0].mxu0
    %v848 = vadd.f32 %v394, %v847
    %v849 = vpop.f32.mrb[0].mxu0
    %v850 = vadd.f32 %v398, %v849
    %851 = vdwg.mxu0
    %852 = vmatprep.subr.bf16.mxu0 %v540
    %853 = vmatpush1.bf16.msra.mxu0 %v539
    %854 = vmatprep.subr.bf16.mxu0 %v556
    %855 = vmatpush1.bf16.msra.mxu0 %v555
    %856 = vmatprep.subr.bf16.mxu0 0
    %857 = vmatpush1.bf16.msra.mxu0 0
    %858 = vmatprep.subr.bf16.mxu0 0
    %859 = vmatpush1.bf16.msra.mxu0 0
    %860 = vmatprep.subr.bf16.mxu0 0
    %861 = vmatpush1.bf16.msra.mxu0 0
    %862 = vmatprep.subr.bf16.mxu0 0
    %863 = vmatpush1.bf16.msra.mxu0 0
    %864 = vmatprep.subr.bf16.mxu0 0
    %865 = vmatpush1.bf16.msra.mxu0 0
    %866 = vmatprep.subr.bf16.mxu0 0
    %867 = vmatpush1.bf16.msra.mxu0 0
    %868 = vmatprep.subr.bf16.mxu0 0
    %869 = vmatpush1.bf16.msra.mxu0 0
    %870 = vmatprep.subr.bf16.mxu0 0
    %871 = vmatpush1.bf16.msra.mxu0 0
    %872 = vmatprep.subr.bf16.mxu0 0
    %873 = vmatpush1.bf16.msra.mxu0 0
    %874 = vmatprep.subr.bf16.mxu0 0
    %875 = vmatpush1.bf16.msra.mxu0 0
    %876 = vmatprep.subr.bf16.mxu0 0
    %877 = vmatpush1.bf16.msra.mxu0 0
    %878 = vmatprep.subr.bf16.mxu0 0
    %879 = vmatpush1.bf16.msra.mxu0 0
    %880 = vmatprep.subr.bf16.mxu0 0
    %881 = vmatpush1.bf16.msra.mxu0 0
    %882 = vmatprep.subr.bf16.mxu0 0
    %883 = vmatpush1.bf16.msra.mxu0 0
    %884 = vmatprep.mubr.bf16.mxu0 0
    %885 = vmatmul.mubr.bf16.gmra.mrb[0].mxu0 %v592
    %v886 = vpop.f32.mrb[0].mxu0
    %v887 = vadd.f32 %v402, %v886
    %v888 = vpop.f32.mrb[0].mxu0
    %v889 = vadd.f32 %v406, %v888
    %v890 = vpop.f32.mrb[0].mxu0
    %v891 = vadd.f32 %v402, %v890
    %v892 = vpop.f32.mrb[0].mxu0
    %v893 = vadd.f32 %v406, %v892
    %894 = vdwg.mxu0
    %895 = vmatprep.subr.bf16.mxu0 %v542
    %896 = vmatpush1.bf16.msra.mxu0 %v541
    %897 = vmatprep.subr.bf16.mxu0 %v558
    %898 = vmatpush1.bf16.msra.mxu0 %v557
    %899 = vmatprep.subr.bf16.mxu0 0
    %900 = vmatpush1.bf16.msra.mxu0 0
    %901 = vmatprep.subr.bf16.mxu0 0
    %902 = vmatpush1.bf16.msra.mxu0 0
    %903 = vmatprep.subr.bf16.mxu0 0
    %904 = vmatpush1.bf16.msra.mxu0 0
    %905 = vmatprep.subr.bf16.mxu0 0
    %906 = vmatpush1.bf16.msra.mxu0 0
    %907 = vmatprep.subr.bf16.mxu0 0
    %908 = vmatpush1.bf16.msra.mxu0 0
    %909 = vmatprep.subr.bf16.mxu0 0
    %910 = vmatpush1.bf16.msra.mxu0 0
    %911 = vmatprep.subr.bf16.mxu0 0
    %912 = vmatpush1.bf16.msra.mxu0 0
    %913 = vmatprep.subr.bf16.mxu0 0
    %914 = vmatpush1.bf16.msra.mxu0 0
    %915 = vmatprep.subr.bf16.mxu0 0
    %916 = vmatpush1.bf16.msra.mxu0 0
    %917 = vmatprep.subr.bf16.mxu0 0
    %918 = vmatpush1.bf16.msra.mxu0 0
    %919 = vmatprep.subr.bf16.mxu0 0
    %920 = vmatpush1.bf16.msra.mxu0 0
    %921 = vmatprep.subr.bf16.mxu0 0
    %922 = vmatpush1.bf16.msra.mxu0 0
    %923 = vmatprep.subr.bf16.mxu0 0
    %924 = vmatpush1.bf16.msra.mxu0 0
    %925 = vmatprep.subr.bf16.mxu0 0
    %926 = vmatpush1.bf16.msra.mxu0 0
    %927 = vmatprep.mubr.bf16.mxu0 0
    %928 = vmatmul.mubr.bf16.gmra.mrb[0].mxu0 %v592
    %v929 = vpop.f32.mrb[0].mxu0
    %v930 = vadd.f32 %v410, %v929
    %v931 = vpop.f32.mrb[0].mxu0
    %v932 = vadd.f32 %v414, %v931
    %v933 = vpop.f32.mrb[0].mxu0
    %v934 = vadd.f32 %v410, %v933
    %v935 = vpop.f32.mrb[0].mxu0
    %v936 = vadd.f32 %v414, %v935
    %937 = vdwg.mxu0
    %v938 = vmax.f32 %v629, 0.0
    %v939 = vmax.f32 %v631, 0.0
    %v940 = vmax.f32 %v672, 0.0
    %v941 = vmax.f32 %v674, 0.0
    %v942 = vmax.f32 %v715, 0.0
    %v943 = vmax.f32 %v717, 0.0
    %v944 = vmax.f32 %v758, 0.0
    %v945 = vmax.f32 %v760, 0.0
    %v946 = vmax.f32 %v801, 0.0
    %v947 = vmax.f32 %v803, 0.0
    %v948 = vmax.f32 %v844, 0.0
    %v949 = vmax.f32 %v846, 0.0
    %v950 = vmax.f32 %v887, 0.0
    %v951 = vmax.f32 %v889, 0.0
    %v952 = vmax.f32 %v930, 0.0
    %v953 = vmax.f32 %v932, 0.0
    %v954 = vmax.f32 %v633, 0.0
    %v955 = vmax.f32 %v635, 0.0
    %v956 = vmax.f32 %v676, 0.0
    %v957 = vmax.f32 %v678, 0.0
    %v958 = vmax.f32 %v719, 0.0
    %v959 = vmax.f32 %v721, 0.0
    %v960 = vmax.f32 %v762, 0.0
    %v961 = vmax.f32 %v764, 0.0
    %v962 = vmax.f32 %v805, 0.0
    %v963 = vmax.f32 %v807, 0.0
    %v964 = vmax.f32 %v848, 0.0
    %v965 = vmax.f32 %v850, 0.0
    %v966 = vmax.f32 %v891, 0.0
    %v967 = vmax.f32 %v893, 0.0
    %v968 = vmax.f32 %v934, 0.0
    %v969 = vmax.f32 %v936, 0.0
    %v970 = vpack.c.bf16 %v954, %v938
    %v971 = vpack.c.bf16 %v955, %v939
    %v972 = vpack.c.bf16 %v956, %v940
    %v973 = vpack.c.bf16 %v957, %v941
    %v974 = vpack.c.bf16 %v958, %v942
    %v975 = vpack.c.bf16 %v959, %v943
    %v976 = vpack.c.bf16 %v960, %v944
    %v977 = vpack.c.bf16 %v961, %v945
    %v978 = vpack.c.bf16 %v962, %v946
    %v979 = vpack.c.bf16 %v963, %v947
    %v980 = vpack.c.bf16 %v964, %v948
    %v981 = vpack.c.bf16 %v965, %v949
    %v982 = vpack.c.bf16 %v966, %v950
    %v983 = vpack.c.bf16 %v967, %v951
    %v984 = vpack.c.bf16 %v968, %v952
    %v985 = vpack.c.bf16 %v969, %v953
    %v986 = vlaneseq
    %v987 = vshrl.u32 %v986, 7
    %v988 = vsub.s32 6, %v987
    %v989 = vrot.slane %v41, %v988
    %v1022 = vunpack.c.l.b16 %v316
    %v1023 = vunpack.c.h.b16 %v316
    %v1024 = vunpack.c.l.b16 %v317
    %v1025 = vunpack.c.h.b16 %v317
    %v1026 = vunpack.c.l.b16 %v318
    %v1027 = vunpack.c.h.b16 %v318
    %v1028 = vunpack.c.l.b16 %v319
    %v1029 = vunpack.c.h.b16 %v319
    %v1030 = vunpack.c.l.b16 %v320
    %v1031 = vunpack.c.h.b16 %v320
    %v1032 = vunpack.c.l.b16 %v321
    %v1033 = vunpack.c.h.b16 %v321
    %v1034 = vunpack.c.l.b16 %v322
    %v1035 = vunpack.c.h.b16 %v322
    %v1036 = vunpack.c.l.b16 %v323
    %v1037 = vunpack.c.h.b16 %v323
    %v1038 = vunpack.c.l.b16 %v324
    %v1039 = vunpack.c.h.b16 %v324
    %v1040 = vunpack.c.l.b16 %v325
    %v1041 = vunpack.c.h.b16 %v325
    %v1042 = vunpack.c.l.b16 %v326
    %v1043 = vunpack.c.h.b16 %v326
    %v1044 = vunpack.c.l.b16 %v327
    %v1045 = vunpack.c.h.b16 %v327
    %v1046 = vunpack.c.l.b16 %v328
    %v1047 = vunpack.c.h.b16 %v328
    %v1048 = vunpack.c.l.b16 %v329
    %v1049 = vunpack.c.h.b16 %v329
    %v1050 = vunpack.c.l.b16 %v330
    %v1051 = vunpack.c.h.b16 %v330
    %v1052 = vunpack.c.l.b16 %v331
    %v1053 = vunpack.c.h.b16 %v331
    %v1054 = vunpack.c.l.b16 %v332
    %v1055 = vunpack.c.h.b16 %v332
    %v1056 = vunpack.c.l.b16 %v333
    %v1057 = vunpack.c.h.b16 %v333
    %v1058 = vunpack.c.l.b16 %v334
    %v1059 = vunpack.c.h.b16 %v334
    %v1060 = vunpack.c.l.b16 %v335
    %v1061 = vunpack.c.h.b16 %v335
    %v1062 = vunpack.c.l.b16 %v336
    %v1063 = vunpack.c.h.b16 %v336
    %v1064 = vunpack.c.l.b16 %v337
    %v1065 = vunpack.c.h.b16 %v337
    %v1066 = vunpack.c.l.b16 %v338
    %v1067 = vunpack.c.h.b16 %v338
    %v1068 = vunpack.c.l.b16 %v339
    %v1069 = vunpack.c.h.b16 %v339
    %v1070 = vunpack.c.l.b16 %v340
    %v1071 = vunpack.c.h.b16 %v340
    %v1072 = vunpack.c.l.b16 %v341
    %v1073 = vunpack.c.h.b16 %v341
    %v1074 = vunpack.c.l.b16 %v342
    %v1075 = vunpack.c.h.b16 %v342
    %v1076 = vunpack.c.l.b16 %v343
    %v1077 = vunpack.c.h.b16 %v343
    %v1078 = vunpack.c.l.b16 %v344
    %v1079 = vunpack.c.h.b16 %v344
    %v1080 = vunpack.c.l.b16 %v345
    %v1081 = vunpack.c.h.b16 %v345
    %v1082 = vunpack.c.l.b16 %v346
    %v1083 = vunpack.c.h.b16 %v346
    %v1084 = vunpack.c.l.b16 %v347
    %v1085 = vunpack.c.h.b16 %v347
    %v1086 = vpack.c.b16 %v1038, %v1022
    %v1087 = vpack.c.b16 %v1039, %v1023
    %v1088 = vpack.c.b16 %v1040, %v1024
    %v1089 = vpack.c.b16 %v1041, %v1025
    %v1090 = vpack.c.b16 %v1042, %v1026
    %v1091 = vpack.c.b16 %v1043, %v1027
    %v1092 = vpack.c.b16 %v1044, %v1028
    %v1093 = vpack.c.b16 %v1045, %v1029
    %v1094 = vpack.c.b16 %v1046, %v1030
    %v1095 = vpack.c.b16 %v1047, %v1031
    %v1096 = vpack.c.b16 %v1048, %v1032
    %v1097 = vpack.c.b16 %v1049, %v1033
    %v1098 = vpack.c.b16 %v1050, %v1034
    %v1099 = vpack.c.b16 %v1051, %v1035
    %v1100 = vpack.c.b16 %v1052, %v1036
    %v1101 = vpack.c.b16 %v1053, %v1037
    %v1102 = vpack.c.b16 %v1070, %v1054
    %v1103 = vpack.c.b16 %v1071, %v1055
    %v1104 = vpack.c.b16 %v1072, %v1056
    %v1105 = vpack.c.b16 %v1073, %v1057
    %v1106 = vpack.c.b16 %v1074, %v1058
    %v1107 = vpack.c.b16 %v1075, %v1059
    %v1108 = vpack.c.b16 %v1076, %v1060
    %v1109 = vpack.c.b16 %v1077, %v1061
    %v1110 = vpack.c.b16 %v1078, %v1062
    %v1111 = vpack.c.b16 %v1079, %v1063
    %v1112 = vpack.c.b16 %v1080, %v1064
    %v1113 = vpack.c.b16 %v1081, %v1065
    %v1114 = vpack.c.b16 %v1082, %v1066
    %v1115 = vpack.c.b16 %v1083, %v1067
    %v1116 = vpack.c.b16 %v1084, %v1068
    %v1117 = vpack.c.b16 %v1085, %v1069
    %1150 = vmatprep.subr.bf16.mxu0 %v1087
    %1151 = vmatpush1.bf16.xpose.msra.mxu0 %v1086
    %1152 = vmatprep.subr.bf16.mxu0 %v1103
    %1153 = vmatpush1.bf16.xpose.msra.mxu0 %v1102
    %1154 = vmatprep.subr.bf16.mxu0 0
    %1155 = vmatpush1.bf16.xpose.msra.mxu0 0
    %1156 = vmatprep.subr.bf16.mxu0 0
    %1157 = vmatpush1.bf16.xpose.msra.mxu0 0
    %1158 = vmatprep.subr.bf16.mxu0 0
    %1159 = vmatpush1.bf16.xpose.msra.mxu0 0
    %1160 = vmatprep.subr.bf16.mxu0 0
    %1161 = vmatpush1.bf16.xpose.msra.mxu0 0
    %1162 = vmatprep.subr.bf16.mxu0 0
    %1163 = vmatpush1.bf16.xpose.msra.mxu0 0
    %1164 = vmatprep.subr.bf16.mxu0 0
    %1165 = vmatpush1.bf16.xpose.msra.mxu0 0
    %1166 = vmatprep.subr.bf16.mxu0 0
    %1167 = vmatpush1.bf16.xpose.msra.mxu0 0
    %1168 = vmatprep.subr.bf16.mxu0 0
    %1169 = vmatpush1.bf16.xpose.msra.mxu0 0
    %1170 = vmatprep.subr.bf16.mxu0 0
    %1171 = vmatpush1.bf16.xpose.msra.mxu0 0
    %1172 = vmatprep.subr.bf16.mxu0 0
    %1173 = vmatpush1.bf16.xpose.msra.mxu0 0
    %1174 = vmatprep.subr.bf16.mxu0 0
    %1175 = vmatpush1.bf16.xpose.msra.mxu0 0
    %1176 = vmatprep.subr.bf16.mxu0 0
    %1177 = vmatpush1.bf16.xpose.msra.mxu0 0
    %1178 = vmatprep.subr.bf16.mxu0 0
    %1179 = vmatpush1.bf16.xpose.msra.mxu0 0
    %1180 = vmatprep.subr.bf16.mxu0 0
    %1181 = vmatpush1.bf16.xpose.msra.mxu0 0
    %1182 = vmatprep.mubr.bf16.mxu0 %v971
    %1183 = vmatmul.mubr.bf16.gmra.mrb[0].mxu0 %v970
    %v1184 = vpop.f32.mrb[0].mxu0
    %v1185 = vadd.f32 %v989, %v1184
    %v1186 = vpop.f32.mrb[0].mxu0
    %v1187 = vpop.f32.mrb[0].mxu0
    %v1188 = vadd.f32 %v989, %v1187
    %v1189 = vpop.f32.mrb[0].mxu0
    %1190 = vdwg.mxu0
    %1191 = vmatprep.subr.bf16.mxu0 %v1089
    %1192 = vmatpush1.bf16.xpose.msra.mxu0 %v1088
    %1193 = vmatprep.subr.bf16.mxu0 %v1105
    %1194 = vmatpush1.bf16.xpose.msra.mxu0 %v1104
    %1195 = vmatprep.subr.bf16.mxu0 0
    %1196 = vmatpush1.bf16.xpose.msra.mxu0 0
    %1197 = vmatprep.subr.bf16.mxu0 0
    %1198 = vmatpush1.bf16.xpose.msra.mxu0 0
    %1199 = vmatprep.subr.bf16.mxu0 0
    %1200 = vmatpush1.bf16.xpose.msra.mxu0 0
    %1201 = vmatprep.subr.bf16.mxu0 0
    %1202 = vmatpush1.bf16.xpose.msra.mxu0 0
    %1203 = vmatprep.subr.bf16.mxu0 0
    %1204 = vmatpush1.bf16.xpose.msra.mxu0 0
    %1205 = vmatprep.subr.bf16.mxu0 0
    %1206 = vmatpush1.bf16.xpose.msra.mxu0 0
    %1207 = vmatprep.subr.bf16.mxu0 0
    %1208 = vmatpush1.bf16.xpose.msra.mxu0 0
    %1209 = vmatprep.subr.bf16.mxu0 0
    %1210 = vmatpush1.bf16.xpose.msra.mxu0 0
    %1211 = vmatprep.subr.bf16.mxu0 0
    %1212 = vmatpush1.bf16.xpose.msra.mxu0 0
    %1213 = vmatprep.subr.bf16.mxu0 0
    %1214 = vmatpush1.bf16.xpose.msra.mxu0 0
    %1215 = vmatprep.subr.bf16.mxu0 0
    %1216 = vmatpush1.bf16.xpose.msra.mxu0 0
    %1217 = vmatprep.subr.bf16.mxu0 0
    %1218 = vmatpush1.bf16.xpose.msra.mxu0 0
    %1219 = vmatprep.subr.bf16.mxu0 0
    %1220 = vmatpush1.bf16.xpose.msra.mxu0 0
    %1221 = vmatprep.subr.bf16.mxu0 0
    %1222 = vmatpush1.bf16.xpose.msra.mxu0 0
    %1223 = vmatprep.mubr.bf16.mxu0 %v973
    %1224 = vmatmul.mubr.bf16.gmra.mrb[0].mxu0 %v972
    %v1225 = vpop.f32.mrb[0].mxu0
    %v1226 = vadd.f32 %v1185, %v1225
    %v1227 = vpop.f32.mrb[0].mxu0
    %v1228 = vpop.f32.mrb[0].mxu0
    %v1229 = vadd.f32 %v1188, %v1228
    %v1230 = vpop.f32.mrb[0].mxu0
    %1231 = vdwg.mxu0
    %1232 = vmatprep.subr.bf16.mxu0 %v1091
    %1233 = vmatpush1.bf16.xpose.msra.mxu0 %v1090
    %1234 = vmatprep.subr.bf16.mxu0 %v1107
    %1235 = vmatpush1.bf16.xpose.msra.mxu0 %v1106
    %1236 = vmatprep.subr.bf16.mxu0 0
    %1237 = vmatpush1.bf16.xpose.msra.mxu0 0
    %1238 = vmatprep.subr.bf16.mxu0 0
    %1239 = vmatpush1.bf16.xpose.msra.mxu0 0
    %1240 = vmatprep.subr.bf16.mxu0 0
    %1241 = vmatpush1.bf16.xpose.msra.mxu0 0
    %1242 = vmatprep.subr.bf16.mxu0 0
    %1243 = vmatpush1.bf16.xpose.msra.mxu0 0
    %1244 = vmatprep.subr.bf16.mxu0 0
    %1245 = vmatpush1.bf16.xpose.msra.mxu0 0
    %1246 = vmatprep.subr.bf16.mxu0 0
    %1247 = vmatpush1.bf16.xpose.msra.mxu0 0
    %1248 = vmatprep.subr.bf16.mxu0 0
    %1249 = vmatpush1.bf16.xpose.msra.mxu0 0
    %1250 = vmatprep.subr.bf16.mxu0 0
    %1251 = vmatpush1.bf16.xpose.msra.mxu0 0
    %1252 = vmatprep.subr.bf16.mxu0 0
    %1253 = vmatpush1.bf16.xpose.msra.mxu0 0
    %1254 = vmatprep.subr.bf16.mxu0 0
    %1255 = vmatpush1.bf16.xpose.msra.mxu0 0
    %1256 = vmatprep.subr.bf16.mxu0 0
    %1257 = vmatpush1.bf16.xpose.msra.mxu0 0
    %1258 = vmatprep.subr.bf16.mxu0 0
    %1259 = vmatpush1.bf16.xpose.msra.mxu0 0
    %1260 = vmatprep.subr.bf16.mxu0 0
    %1261 = vmatpush1.bf16.xpose.msra.mxu0 0
    %1262 = vmatprep.subr.bf16.mxu0 0
    %1263 = vmatpush1.bf16.xpose.msra.mxu0 0
    %1264 = vmatprep.mubr.bf16.mxu0 %v975
    %1265 = vmatmul.mubr.bf16.gmra.mrb[0].mxu0 %v974
    %v1266 = vpop.f32.mrb[0].mxu0
    %v1267 = vadd.f32 %v1226, %v1266
    %v1268 = vpop.f32.mrb[0].mxu0
    %v1269 = vpop.f32.mrb[0].mxu0
    %v1270 = vadd.f32 %v1229, %v1269
    %v1271 = vpop.f32.mrb[0].mxu0
    %1272 = vdwg.mxu0
    %1273 = vmatprep.subr.bf16.mxu0 %v1093
    %1274 = vmatpush1.bf16.xpose.msra.mxu0 %v1092
    %1275 = vmatprep.subr.bf16.mxu0 %v1109
    %1276 = vmatpush1.bf16.xpose.msra.mxu0 %v1108
    %1277 = vmatprep.subr.bf16.mxu0 0
    %1278 = vmatpush1.bf16.xpose.msra.mxu0 0
    %1279 = vmatprep.subr.bf16.mxu0 0
    %1280 = vmatpush1.bf16.xpose.msra.mxu0 0
    %1281 = vmatprep.subr.bf16.mxu0 0
    %1282 = vmatpush1.bf16.xpose.msra.mxu0 0
    %1283 = vmatprep.subr.bf16.mxu0 0
    %1284 = vmatpush1.bf16.xpose.msra.mxu0 0
    %1285 = vmatprep.subr.bf16.mxu0 0
    %1286 = vmatpush1.bf16.xpose.msra.mxu0 0
    %1287 = vmatprep.subr.bf16.mxu0 0
    %1288 = vmatpush1.bf16.xpose.msra.mxu0 0
    %1289 = vmatprep.subr.bf16.mxu0 0
    %1290 = vmatpush1.bf16.xpose.msra.mxu0 0
    %1291 = vmatprep.subr.bf16.mxu0 0
    %1292 = vmatpush1.bf16.xpose.msra.mxu0 0
    %1293 = vmatprep.subr.bf16.mxu0 0
    %1294 = vmatpush1.bf16.xpose.msra.mxu0 0
    %1295 = vmatprep.subr.bf16.mxu0 0
    %1296 = vmatpush1.bf16.xpose.msra.mxu0 0
    %1297 = vmatprep.subr.bf16.mxu0 0
    %1298 = vmatpush1.bf16.xpose.msra.mxu0 0
    %1299 = vmatprep.subr.bf16.mxu0 0
    %1300 = vmatpush1.bf16.xpose.msra.mxu0 0
    %1301 = vmatprep.subr.bf16.mxu0 0
    %1302 = vmatpush1.bf16.xpose.msra.mxu0 0
    %1303 = vmatprep.subr.bf16.mxu0 0
    %1304 = vmatpush1.bf16.xpose.msra.mxu0 0
    %1305 = vmatprep.mubr.bf16.mxu0 %v977
    %1306 = vmatmul.mubr.bf16.gmra.mrb[0].mxu0 %v976
    %v1307 = vpop.f32.mrb[0].mxu0
    %v1308 = vadd.f32 %v1267, %v1307
    %v1309 = vpop.f32.mrb[0].mxu0
    %v1310 = vpop.f32.mrb[0].mxu0
    %v1311 = vadd.f32 %v1270, %v1310
    %v1312 = vpop.f32.mrb[0].mxu0
    %1313 = vdwg.mxu0
    %1314 = vmatprep.subr.bf16.mxu0 %v1095
    %1315 = vmatpush1.bf16.xpose.msra.mxu0 %v1094
    %1316 = vmatprep.subr.bf16.mxu0 %v1111
    %1317 = vmatpush1.bf16.xpose.msra.mxu0 %v1110
    %1318 = vmatprep.subr.bf16.mxu0 0
    %1319 = vmatpush1.bf16.xpose.msra.mxu0 0
    %1320 = vmatprep.subr.bf16.mxu0 0
    %1321 = vmatpush1.bf16.xpose.msra.mxu0 0
    %1322 = vmatprep.subr.bf16.mxu0 0
    %1323 = vmatpush1.bf16.xpose.msra.mxu0 0
    %1324 = vmatprep.subr.bf16.mxu0 0
    %1325 = vmatpush1.bf16.xpose.msra.mxu0 0
    %1326 = vmatprep.subr.bf16.mxu0 0
    %1327 = vmatpush1.bf16.xpose.msra.mxu0 0
    %1328 = vmatprep.subr.bf16.mxu0 0
    %1329 = vmatpush1.bf16.xpose.msra.mxu0 0
    %1330 = vmatprep.subr.bf16.mxu0 0
    %1331 = vmatpush1.bf16.xpose.msra.mxu0 0
    %1332 = vmatprep.subr.bf16.mxu0 0
    %1333 = vmatpush1.bf16.xpose.msra.mxu0 0
    %1334 = vmatprep.subr.bf16.mxu0 0
    %1335 = vmatpush1.bf16.xpose.msra.mxu0 0
    %1336 = vmatprep.subr.bf16.mxu0 0
    %1337 = vmatpush1.bf16.xpose.msra.mxu0 0
    %1338 = vmatprep.subr.bf16.mxu0 0
    %1339 = vmatpush1.bf16.xpose.msra.mxu0 0
    %1340 = vmatprep.subr.bf16.mxu0 0
    %1341 = vmatpush1.bf16.xpose.msra.mxu0 0
    %1342 = vmatprep.subr.bf16.mxu0 0
    %1343 = vmatpush1.bf16.xpose.msra.mxu0 0
    %1344 = vmatprep.subr.bf16.mxu0 0
    %1345 = vmatpush1.bf16.xpose.msra.mxu0 0
    %1346 = vmatprep.mubr.bf16.mxu0 %v979
    %1347 = vmatmul.mubr.bf16.gmra.mrb[0].mxu0 %v978
    %v1348 = vpop.f32.mrb[0].mxu0
    %v1349 = vadd.f32 %v1308, %v1348
    %v1350 = vpop.f32.mrb[0].mxu0
    %v1351 = vpop.f32.mrb[0].mxu0
    %v1352 = vadd.f32 %v1311, %v1351
    %v1353 = vpop.f32.mrb[0].mxu0
    %1354 = vdwg.mxu0
    %1355 = vmatprep.subr.bf16.mxu0 %v1097
    %1356 = vmatpush1.bf16.xpose.msra.mxu0 %v1096
    %1357 = vmatprep.subr.bf16.mxu0 %v1113
    %1358 = vmatpush1.bf16.xpose.msra.mxu0 %v1112
    %1359 = vmatprep.subr.bf16.mxu0 0
    %1360 = vmatpush1.bf16.xpose.msra.mxu0 0
    %1361 = vmatprep.subr.bf16.mxu0 0
    %1362 = vmatpush1.bf16.xpose.msra.mxu0 0
    %1363 = vmatprep.subr.bf16.mxu0 0
    %1364 = vmatpush1.bf16.xpose.msra.mxu0 0
    %1365 = vmatprep.subr.bf16.mxu0 0
    %1366 = vmatpush1.bf16.xpose.msra.mxu0 0
    %1367 = vmatprep.subr.bf16.mxu0 0
    %1368 = vmatpush1.bf16.xpose.msra.mxu0 0
    %1369 = vmatprep.subr.bf16.mxu0 0
    %1370 = vmatpush1.bf16.xpose.msra.mxu0 0
    %1371 = vmatprep.subr.bf16.mxu0 0
    %1372 = vmatpush1.bf16.xpose.msra.mxu0 0
    %1373 = vmatprep.subr.bf16.mxu0 0
    %1374 = vmatpush1.bf16.xpose.msra.mxu0 0
    %1375 = vmatprep.subr.bf16.mxu0 0
    %1376 = vmatpush1.bf16.xpose.msra.mxu0 0
    %1377 = vmatprep.subr.bf16.mxu0 0
    %1378 = vmatpush1.bf16.xpose.msra.mxu0 0
    %1379 = vmatprep.subr.bf16.mxu0 0
    %1380 = vmatpush1.bf16.xpose.msra.mxu0 0
    %1381 = vmatprep.subr.bf16.mxu0 0
    %1382 = vmatpush1.bf16.xpose.msra.mxu0 0
    %1383 = vmatprep.subr.bf16.mxu0 0
    %1384 = vmatpush1.bf16.xpose.msra.mxu0 0
    %1385 = vmatprep.subr.bf16.mxu0 0
    %1386 = vmatpush1.bf16.xpose.msra.mxu0 0
    %1387 = vmatprep.mubr.bf16.mxu0 %v981
    %1388 = vmatmul.mubr.bf16.gmra.mrb[0].mxu0 %v980
    %v1389 = vpop.f32.mrb[0].mxu0
    %v1390 = vadd.f32 %v1349, %v1389
    %v1391 = vpop.f32.mrb[0].mxu0
    %v1392 = vpop.f32.mrb[0].mxu0
    %v1393 = vadd.f32 %v1352, %v1392
    %v1394 = vpop.f32.mrb[0].mxu0
    %1395 = vdwg.mxu0
    %1396 = vmatprep.subr.bf16.mxu0 %v1099
    %1397 = vmatpush1.bf16.xpose.msra.mxu0 %v1098
    %1398 = vmatprep.subr.bf16.mxu0 %v1115
    %1399 = vmatpush1.bf16.xpose.msra.mxu0 %v1114
    %1400 = vmatprep.subr.bf16.mxu0 0
    %1401 = vmatpush1.bf16.xpose.msra.mxu0 0
    %1402 = vmatprep.subr.bf16.mxu0 0
    %1403 = vmatpush1.bf16.xpose.msra.mxu0 0
    %1404 = vmatprep.subr.bf16.mxu0 0
    %1405 = vmatpush1.bf16.xpose.msra.mxu0 0
    %1406 = vmatprep.subr.bf16.mxu0 0
    %1407 = vmatpush1.bf16.xpose.msra.mxu0 0
    %1408 = vmatprep.subr.bf16.mxu0 0
    %1409 = vmatpush1.bf16.xpose.msra.mxu0 0
    %1410 = vmatprep.subr.bf16.mxu0 0
    %1411 = vmatpush1.bf16.xpose.msra.mxu0 0
    %1412 = vmatprep.subr.bf16.mxu0 0
    %1413 = vmatpush1.bf16.xpose.msra.mxu0 0
    %1414 = vmatprep.subr.bf16.mxu0 0
    %1415 = vmatpush1.bf16.xpose.msra.mxu0 0
    %1416 = vmatprep.subr.bf16.mxu0 0
    %1417 = vmatpush1.bf16.xpose.msra.mxu0 0
    %1418 = vmatprep.subr.bf16.mxu0 0
    %1419 = vmatpush1.bf16.xpose.msra.mxu0 0
    %1420 = vmatprep.subr.bf16.mxu0 0
    %1421 = vmatpush1.bf16.xpose.msra.mxu0 0
    %1422 = vmatprep.subr.bf16.mxu0 0
    %1423 = vmatpush1.bf16.xpose.msra.mxu0 0
    %1424 = vmatprep.subr.bf16.mxu0 0
    %1425 = vmatpush1.bf16.xpose.msra.mxu0 0
    %1426 = vmatprep.subr.bf16.mxu0 0
    %1427 = vmatpush1.bf16.xpose.msra.mxu0 0
    %1428 = vmatprep.mubr.bf16.mxu0 %v983
    %1429 = vmatmul.mubr.bf16.gmra.mrb[0].mxu0 %v982
    %v1430 = vpop.f32.mrb[0].mxu0
    %v1431 = vadd.f32 %v1390, %v1430
    %v1432 = vpop.f32.mrb[0].mxu0
    %v1433 = vpop.f32.mrb[0].mxu0
    %v1434 = vadd.f32 %v1393, %v1433
    %v1435 = vpop.f32.mrb[0].mxu0
    %1436 = vdwg.mxu0
    %1437 = vmatprep.subr.bf16.mxu0 %v1101
    %1438 = vmatpush1.bf16.xpose.msra.mxu0 %v1100
    %1439 = vmatprep.subr.bf16.mxu0 %v1117
    %1440 = vmatpush1.bf16.xpose.msra.mxu0 %v1116
    %1441 = vmatprep.subr.bf16.mxu0 0
    %1442 = vmatpush1.bf16.xpose.msra.mxu0 0
    %1443 = vmatprep.subr.bf16.mxu0 0
    %1444 = vmatpush1.bf16.xpose.msra.mxu0 0
    %1445 = vmatprep.subr.bf16.mxu0 0
    %1446 = vmatpush1.bf16.xpose.msra.mxu0 0
    %1447 = vmatprep.subr.bf16.mxu0 0
    %1448 = vmatpush1.bf16.xpose.msra.mxu0 0
    %1449 = vmatprep.subr.bf16.mxu0 0
    %1450 = vmatpush1.bf16.xpose.msra.mxu0 0
    %1451 = vmatprep.subr.bf16.mxu0 0
    %1452 = vmatpush1.bf16.xpose.msra.mxu0 0
    %1453 = vmatprep.subr.bf16.mxu0 0
    %1454 = vmatpush1.bf16.xpose.msra.mxu0 0
    %1455 = vmatprep.subr.bf16.mxu0 0
    %1456 = vmatpush1.bf16.xpose.msra.mxu0 0
    %1457 = vmatprep.subr.bf16.mxu0 0
    %1458 = vmatpush1.bf16.xpose.msra.mxu0 0
    %1459 = vmatprep.subr.bf16.mxu0 0
    %1460 = vmatpush1.bf16.xpose.msra.mxu0 0
    %1461 = vmatprep.subr.bf16.mxu0 0
    %1462 = vmatpush1.bf16.xpose.msra.mxu0 0
    %1463 = vmatprep.subr.bf16.mxu0 0
    %1464 = vmatpush1.bf16.xpose.msra.mxu0 0
    %1465 = vmatprep.subr.bf16.mxu0 0
    %1466 = vmatpush1.bf16.xpose.msra.mxu0 0
    %1467 = vmatprep.subr.bf16.mxu0 0
    %1468 = vmatpush1.bf16.xpose.msra.mxu0 0
    %1469 = vmatprep.mubr.bf16.mxu0 %v985
    %1470 = vmatmul.mubr.bf16.gmra.mrb[0].mxu0 %v984
    %v1471 = vpop.f32.mrb[0].mxu0
    %v1472 = vadd.f32 %v1431, %v1471
    %v1473 = vpop.f32.mrb[0].mxu0
    %v1474 = vpop.f32.mrb[0].mxu0
    %v1475 = vadd.f32 %v1434, %v1474
    %v1476 = vpop.f32.mrb[0].mxu0
    %1477 = vdwg.mxu0
    %v1478 = vadd.f32 %v281, %v1472
    %v1479 = vadd.f32 %v282, %v1475
    %v1480 = vsel %vm160, %v1478, 0.0
    %1481 = vadd.xlane.f32.xlu0 %v1480
    %v1482 = vpop.xlane.xlu0 %1481
    %v1483 = vsel %vm160, %v1479, 0.0
    %1484 = vadd.xlane.f32.xlu0 %v1483
    %v1485 = vpop.xlane.xlu0 %1484
    %v1486 = vmul.f32 %v1482, %v250
    %v1487 = vmul.f32 %v1485, %v250
    %v1488 = vsub.f32 %v1478, %v1486
    %v1489 = vsub.f32 %v1479, %v1487
    %v1490 = vmul.f32 %v1488, %v1488
    %v1491 = vmul.f32 %v1489, %v1489
    %v1492 = vsel %vm160, %v1490, 0.0
    %1493 = vadd.xlane.f32.xlu0 %v1492
    %v1494 = vpop.xlane.xlu0 %1493
    %v1495 = vsel %vm160, %v1491, 0.0
    %1496 = vadd.xlane.f32.xlu0 %v1495
    %v1497 = vpop.xlane.xlu0 %1496
    %v1498 = vmul.f32 %v1494, %v250
    %v1499 = vmul.f32 %v1497, %v250
    %v1500 = vadd.f32 %v1498, 1e-05
    %v1501 = vadd.f32 %v1499, 1e-05
    %v1502 = vrsqrt.pop %v1500
    %v1503 = vrsqrt.pop %v1501
    %v1504 = vmul.f32 %v1488, %v1502
    %v1505 = vmul.f32 %v1489, %v1503
    %v1506 = vlaneseq
    %v1507 = vshrl.u32 %v1506, 7
    %v1508 = vsub.s32 4, %v1507
    %v1509 = vrot.slane %v41, %v1508
    %v1510 = vmul.f32 %v1504, %v1509
    %v1511 = vmul.f32 %v1505, %v1509
    %v1512 = vlaneseq
    %v1513 = vshrl.u32 %v1512, 7
    %v1514 = vsub.s32 5, %v1513
    %v1515 = vrot.slane %v41, %v1514
    %v1516 = vadd.f32 %v1510, %v1515
    %v1517 = vadd.f32 %v1511, %v1515
    %v1518 = vlaneseq
    %v1519 = vshrl.u32 %v1518, 7
    %v1520 = vsub.s32 7, %v1519
    %v1521 = vrot.slane %v45, %v1520
    %vm1526 = vcmask 1040384
    %v1527 = vrot.slane %v41, 7
    %v1528 = vrot.slane %v42, 7
    %v1529 = vsel %vm1526, %v1527, %v1528
    %v1530 = vrot.slane %v43, 7
    %v1531 = vsel %vm1526, %v1528, %v1530
    %v1532 = vrot.slane %v44, 7
    %v1533 = vsel %vm1526, %v1530, %v1532
    %v1534 = vrot.slane %v45, 7
    %v1535 = vsel %vm1526, %v1532, %v1534
    %v1541 = vsel %vm160, %v1516, 0
    %v1544 = vsel %vm160, %v1517, 0
    %1546 = vmatprep.subr.mxu0 0.0
    %1547 = vmatpush1.msra.mxu0 %v1529
    %1548 = vmatprep.subr.mxu0 0.0
    %1549 = vmatpush1.msra.mxu0 %v1531
    %1550 = vmatprep.subr.mxu0 0.0
    %1551 = vmatpush1.msra.mxu0 %v1533
    %1552 = vmatprep.subr.mxu0 0.0
    %1553 = vmatpush1.msra.mxu0 %v1535
    %1554 = vmatprep.subr.mxu0 0.0
    %1555 = vmatpush1.msra.mxu0 0.0
    %1556 = vmatprep.subr.mxu0 0.0
    %1557 = vmatpush1.msra.mxu0 0.0
    %1558 = vmatprep.subr.mxu0 0.0
    %1559 = vmatpush1.msra.mxu0 0.0
    %1560 = vmatprep.subr.mxu0 0.0
    %1561 = vmatpush1.msra.mxu0 0.0
    %1562 = vmatprep.subr.mxu0 0.0
    %1563 = vmatpush1.msra.mxu0 0.0
    %1564 = vmatprep.subr.mxu0 0.0
    %1565 = vmatpush1.msra.mxu0 0.0
    %1566 = vmatprep.subr.mxu0 0.0
    %1567 = vmatpush1.msra.mxu0 0.0
    %1568 = vmatprep.subr.mxu0 0.0
    %1569 = vmatpush1.msra.mxu0 0.0
    %1570 = vmatprep.subr.mxu0 0.0
    %1571 = vmatpush1.msra.mxu0 0.0
    %1572 = vmatprep.subr.mxu0 0.0
    %1573 = vmatpush1.msra.mxu0 0.0
    %1574 = vmatprep.subr.mxu0 0.0
    %1575 = vmatpush1.msra.mxu0 0.0
    %1576 = vmatprep.subr.mxu0 0.0
    %1577 = vmatpush1.msra.mxu0 0.0
    %1578 = vmatprep.subr.mxu0 0.0
    %1579 = vmatpush1.msra.mxu0 0.0
    %1580 = vmatprep.subr.mxu0 0.0
    %1581 = vmatpush1.msra.mxu0 0.0
    %1582 = vmatprep.subr.mxu0 0.0
    %1583 = vmatpush1.msra.mxu0 0.0
    %1584 = vmatprep.subr.mxu0 0.0
    %1585 = vmatpush1.msra.mxu0 0.0
    %1586 = vmatprep.subr.mxu0 0.0
    %1587 = vmatpush1.msra.mxu0 0.0
    %1588 = vmatprep.subr.mxu0 0.0
    %1589 = vmatpush1.msra.mxu0 0.0
    %1590 = vmatprep.subr.mxu0 0.0
    %1591 = vmatpush1.msra.mxu0 0.0
    %1592 = vmatprep.subr.mxu0 0.0
    %1593 = vmatpush1.msra.mxu0 0.0
    %1594 = vmatprep.subr.mxu0 0.0
    %1595 = vmatpush1.msra.mxu0 0.0
    %1596 = vmatprep.subr.mxu0 0.0
    %1597 = vmatpush1.msra.mxu0 0.0
    %1598 = vmatprep.subr.mxu0 0.0
    %1599 = vmatpush1.msra.mxu0 0.0
    %1600 = vmatprep.subr.mxu0 0.0
    %1601 = vmatpush1.msra.mxu0 0.0
    %1602 = vmatprep.subr.mxu0 0.0
    %1603 = vmatpush1.msra.mxu0 0.0
    %1604 = vmatprep.subr.mxu0 0.0
    %1605 = vmatpush1.msra.mxu0 0.0
    %1606 = vmatprep.subr.mxu0 0.0
    %1607 = vmatpush1.msra.mxu0 0.0
    %1608 = vmatprep.subr.mxu0 0.0
    %1609 = vmatpush1.msra.mxu0 0.0
    %1610 = vmatprep.mubr.f32.mxu0 0.0
    %1611 = vmatmul.mubr.f32.gmra.mrb[0].mxu0 %v1541
    %v1612 = vpop.f32.mrb[0].mxu0
    %v1613 = vadd.f32 %v1521, %v1612
    %v1614 = vpop.f32.mrb[0].mxu0
    %1615 = vmatprep.mubr.f32.mxu0 0.0
    %1616 = vmatmul.mubr.f32.gmra.mrb[0].mxu0 %v1544
    %v1617 = vpop.f32.mrb[0].mxu0
    %v1618 = vadd.f32 %v1521, %v1617
    %v1619 = vpop.f32.mrb[0].mxu0
    %1620 = vdwg.mxu0
    %v1621 = vadd.f32 %v1516, %v1613
    %v1622 = vadd.f32 %v1517, %v1618
    %v1623 = vsel %vm160, %v1621, 0.0
    %1624 = vadd.xlane.f32.xlu0 %v1623
    %v1625 = vpop.xlane.xlu0 %1624
    %v1626 = vsel %vm160, %v1622, 0.0
    %1627 = vadd.xlane.f32.xlu0 %v1626
    %v1628 = vpop.xlane.xlu0 %1627
    %v1629 = vmul.f32 %v1625, %v250
    %v1630 = vmul.f32 %v1628, %v250
    %v1631 = vsub.f32 %v1621, %v1629
    %v1632 = vsub.f32 %v1622, %v1630
    %v1633 = vmul.f32 %v1631, %v1631
    %v1634 = vmul.f32 %v1632, %v1632
    %v1635 = vsel %vm160, %v1633, 0.0
    %1636 = vadd.xlane.f32.xlu0 %v1635
    %v1637 = vpop.xlane.xlu0 %1636
    %v1638 = vsel %vm160, %v1634, 0.0
    %1639 = vadd.xlane.f32.xlu0 %v1638
    %v1640 = vpop.xlane.xlu0 %1639
    %v1641 = vmul.f32 %v1637, %v250
    %v1642 = vmul.f32 %v1640, %v250
    %v1643 = vadd.f32 %v1641, 1e-05
    %v1644 = vadd.f32 %v1642, 1e-05
    %v1645 = vrsqrt.pop %v1643
    %v1646 = vrsqrt.pop %v1644
    %v1647 = vmul.f32 %v1631, %v1645
    %v1648 = vmul.f32 %v1632, %v1646
    %v1649 = vlaneseq
    %v1650 = vshrl.u32 %v1649, 7
    %v1651 = vsub.s32 0, %v1650
    %v1652 = vrot.slane %v46, %v1651
    %v1653 = vmul.f32 %v1647, %v1652
    %v1654 = vmul.f32 %v1648, %v1652
    %v1655 = vlaneseq
    %v1656 = vshrl.u32 %v1655, 7
    %v1657 = vsub.s32 1, %v1656
    %v1658 = vrot.slane %v46, %v1657
    %v1659 = vadd.f32 %v1653, %v1658
    %v1660 = vadd.f32 %v1654, %v1658
    %s1661 = scalar_lea.vmem [#allocation2], 512
    %v1662 = vld [vmem:[%s1661] sm:$0xff]
    %v1663 = vld [vmem:[%s1661 + $0x8] sm:$0xff]
    %v1664 = vld [vmem:[%s1661 + $0x10] sm:$0xff]
    %v1665 = vld [vmem:[%s1661 + $0x18] sm:$0xff]
    %v1666 = vld [vmem:[%s1661 + $0x20] sm:$0xff]
    %v1667 = vld [vmem:[%s1661 + $0x28] sm:$0xff]
    %v1668 = vld [vmem:[%s1661 + $0x30] sm:$0xff]
    %v1669 = vld [vmem:[%s1661 + $0x38] sm:$0xff]
    %v1670 = vld [vmem:[%s1661 + $0x40] sm:$0xff]
    %v1671 = vld [vmem:[%s1661 + $0x48] sm:$0xff]
    %v1672 = vld [vmem:[%s1661 + $0x50] sm:$0xff]
    %v1673 = vld [vmem:[%s1661 + $0x58] sm:$0xff]
    %v1674 = vld [vmem:[%s1661 + $0x60] sm:$0xff]
    %v1675 = vld [vmem:[%s1661 + $0x68] sm:$0xff]
    %v1676 = vld [vmem:[%s1661 + $0x70] sm:$0xff]
    %v1677 = vld [vmem:[%s1661 + $0x78] sm:$0xff]
    %v1678 = vld [vmem:[%s1661 + $0x80] sm:$0xff]
    %v1679 = vld [vmem:[%s1661 + $0x88] sm:$0xff]
    %v1680 = vld [vmem:[%s1661 + $0x90] sm:$0xff]
    %v1681 = vld [vmem:[%s1661 + $0x98] sm:$0xff]
    %v1682 = vld [vmem:[%s1661 + $0xa0] sm:$0xff]
    %v1683 = vld [vmem:[%s1661 + $0xa8] sm:$0xff]
    %v1684 = vld [vmem:[%s1661 + $0xb0] sm:$0xff]
    %v1685 = vld [vmem:[%s1661 + $0xb8] sm:$0xff]
    %v1686 = vld [vmem:[%s1661 + $0xc0] sm:$0xff]
    %v1687 = vld [vmem:[%s1661 + $0xc8] sm:$0xff]
    %v1688 = vld [vmem:[%s1661 + $0xd0] sm:$0xff]
    %v1689 = vld [vmem:[%s1661 + $0xd8] sm:$0xff]
    %v1690 = vld [vmem:[%s1661 + $0xe0] sm:$0xff]
    %v1691 = vld [vmem:[%s1661 + $0xe8] sm:$0xff]
    %v1692 = vld [vmem:[%s1661 + $0xf0] sm:$0xff]
    %v1693 = vld [vmem:[%s1661 + $0xf8] sm:$0xff]
    %s1694 = scalar_lea.vmem [#allocation2], 768
    %v1695 = vld [vmem:[%s1694] sm:$0xff]
    %v1696 = vld [vmem:[%s1694 + $0x8] sm:$0xff]
    %v1697 = vld [vmem:[%s1694 + $0x10] sm:$0xff]
    %v1698 = vld [vmem:[%s1694 + $0x18] sm:$0xff]
    %v1699 = vld [vmem:[%s1694 + $0x20] sm:$0xff]
    %v1700 = vld [vmem:[%s1694 + $0x28] sm:$0xff]
    %v1701 = vld [vmem:[%s1694 + $0x30] sm:$0xff]
    %v1702 = vld [vmem:[%s1694 + $0x38] sm:$0xff]
    %v1703 = vld [vmem:[%s1694 + $0x40] sm:$0xff]
    %v1704 = vld [vmem:[%s1694 + $0x48] sm:$0xff]
    %v1705 = vld [vmem:[%s1694 + $0x50] sm:$0xff]
    %v1706 = vld [vmem:[%s1694 + $0x58] sm:$0xff]
    %v1707 = vld [vmem:[%s1694 + $0x60] sm:$0xff]
    %v1708 = vld [vmem:[%s1694 + $0x68] sm:$0xff]
    %v1709 = vld [vmem:[%s1694 + $0x70] sm:$0xff]
    %v1710 = vld [vmem:[%s1694 + $0x78] sm:$0xff]
    %v1711 = vld [vmem:[%s1694 + $0x80] sm:$0xff]
    %v1712 = vld [vmem:[%s1694 + $0x88] sm:$0xff]
    %v1713 = vld [vmem:[%s1694 + $0x90] sm:$0xff]
    %v1714 = vld [vmem:[%s1694 + $0x98] sm:$0xff]
    %v1715 = vld [vmem:[%s1694 + $0xa0] sm:$0xff]
    %v1716 = vld [vmem:[%s1694 + $0xa8] sm:$0xff]
    %v1717 = vld [vmem:[%s1694 + $0xb0] sm:$0xff]
    %v1718 = vld [vmem:[%s1694 + $0xb8] sm:$0xff]
    %v1719 = vld [vmem:[%s1694 + $0xc0] sm:$0xff]
    %v1720 = vld [vmem:[%s1694 + $0xc8] sm:$0xff]
    %v1721 = vld [vmem:[%s1694 + $0xd0] sm:$0xff]
    %v1722 = vld [vmem:[%s1694 + $0xd8] sm:$0xff]
    %v1723 = vld [vmem:[%s1694 + $0xe0] sm:$0xff]
    %v1724 = vld [vmem:[%s1694 + $0xe8] sm:$0xff]
    %v1725 = vld [vmem:[%s1694 + $0xf0] sm:$0xff]
    %v1726 = vld [vmem:[%s1694 + $0xf8] sm:$0xff]
    %v1727 = vpack.c.bf16 %v1660, %v1659
    %v1730 = vlaneseq
    %v1731 = vshrl.u32 %v1730, 7
    %v1732 = vsub.s32 0, %v1731
    %v1733 = vrot.slane %v49, %v1732
    %v1734 = vlaneseq
    %v1735 = vshrl.u32 %v1734, 7
    %v1736 = vsub.s32 1, %v1735
    %v1737 = vrot.slane %v49, %v1736
    %v1738 = vlaneseq
    %v1739 = vshrl.u32 %v1738, 7
    %v1740 = vsub.s32 2, %v1739
    %v1741 = vrot.slane %v49, %v1740
    %v1742 = vlaneseq
    %v1743 = vshrl.u32 %v1742, 7
    %v1744 = vsub.s32 3, %v1743
    %v1745 = vrot.slane %v49, %v1744
    %v1746 = vlaneseq
    %v1747 = vshrl.u32 %v1746, 7
    %v1748 = vsub.s32 4, %v1747
    %v1749 = vrot.slane %v49, %v1748
    %v1750 = vlaneseq
    %v1751 = vshrl.u32 %v1750, 7
    %v1752 = vsub.s32 5, %v1751
    %v1753 = vrot.slane %v49, %v1752
    %v1754 = vlaneseq
    %v1755 = vshrl.u32 %v1754, 7
    %v1756 = vsub.s32 6, %v1755
    %v1757 = vrot.slane %v49, %v1756
    %v1758 = vlaneseq
    %v1759 = vshrl.u32 %v1758, 7
    %v1760 = vsub.s32 7, %v1759
    %v1761 = vrot.slane %v49, %v1760
    %v1762 = vlaneseq
    %v1763 = vshrl.u32 %v1762, 7
    %v1764 = vsub.s32 0, %v1763
    %v1765 = vrot.slane %v50, %v1764
    %v1766 = vlaneseq
    %v1767 = vshrl.u32 %v1766, 7
    %v1768 = vsub.s32 1, %v1767
    %v1769 = vrot.slane %v50, %v1768
    %v1770 = vlaneseq
    %v1771 = vshrl.u32 %v1770, 7
    %v1772 = vsub.s32 2, %v1771
    %v1773 = vrot.slane %v50, %v1772
    %v1774 = vlaneseq
    %v1775 = vshrl.u32 %v1774, 7
    %v1776 = vsub.s32 3, %v1775
    %v1777 = vrot.slane %v50, %v1776
    %v1778 = vlaneseq
    %v1779 = vshrl.u32 %v1778, 7
    %v1780 = vsub.s32 4, %v1779
    %v1781 = vrot.slane %v50, %v1780
    %v1782 = vlaneseq
    %v1783 = vshrl.u32 %v1782, 7
    %v1784 = vsub.s32 5, %v1783
    %v1785 = vrot.slane %v50, %v1784
    %v1786 = vlaneseq
    %v1787 = vshrl.u32 %v1786, 7
    %v1788 = vsub.s32 6, %v1787
    %v1789 = vrot.slane %v50, %v1788
    %v1790 = vlaneseq
    %v1791 = vshrl.u32 %v1790, 7
    %v1792 = vsub.s32 7, %v1791
    %v1793 = vrot.slane %v50, %v1792
    %v1842 = vunpack.c.l.b16 %v1662
    %v1843 = vunpack.c.h.b16 %v1662
    %v1844 = vunpack.c.l.b16 %v1663
    %v1845 = vunpack.c.h.b16 %v1663
    %v1846 = vunpack.c.l.b16 %v1664
    %v1847 = vunpack.c.h.b16 %v1664
    %v1848 = vunpack.c.l.b16 %v1665
    %v1849 = vunpack.c.h.b16 %v1665
    %v1850 = vunpack.c.l.b16 %v1666
    %v1851 = vunpack.c.h.b16 %v1666
    %v1852 = vunpack.c.l.b16 %v1667
    %v1853 = vunpack.c.h.b16 %v1667
    %v1854 = vunpack.c.l.b16 %v1668
    %v1855 = vunpack.c.h.b16 %v1668
    %v1856 = vunpack.c.l.b16 %v1669
    %v1857 = vunpack.c.h.b16 %v1669
    %v1858 = vunpack.c.l.b16 %v1670
    %v1859 = vunpack.c.h.b16 %v1670
    %v1860 = vunpack.c.l.b16 %v1671
    %v1861 = vunpack.c.h.b16 %v1671
    %v1862 = vunpack.c.l.b16 %v1672
    %v1863 = vunpack.c.h.b16 %v1672
    %v1864 = vunpack.c.l.b16 %v1673
    %v1865 = vunpack.c.h.b16 %v1673
    %v1866 = vunpack.c.l.b16 %v1674
    %v1867 = vunpack.c.h.b16 %v1674
    %v1868 = vunpack.c.l.b16 %v1675
    %v1869 = vunpack.c.h.b16 %v1675
    %v1870 = vunpack.c.l.b16 %v1676
    %v1871 = vunpack.c.h.b16 %v1676
    %v1872 = vunpack.c.l.b16 %v1677
    %v1873 = vunpack.c.h.b16 %v1677
    %v1874 = vunpack.c.l.b16 %v1678
    %v1875 = vunpack.c.h.b16 %v1678
    %v1876 = vunpack.c.l.b16 %v1679
    %v1877 = vunpack.c.h.b16 %v1679
    %v1878 = vunpack.c.l.b16 %v1680
    %v1879 = vunpack.c.h.b16 %v1680
    %v1880 = vunpack.c.l.b16 %v1681
    %v1881 = vunpack.c.h.b16 %v1681
    %v1882 = vunpack.c.l.b16 %v1682
    %v1883 = vunpack.c.h.b16 %v1682
    %v1884 = vunpack.c.l.b16 %v1683
    %v1885 = vunpack.c.h.b16 %v1683
    %v1886 = vunpack.c.l.b16 %v1684
    %v1887 = vunpack.c.h.b16 %v1684
    %v1888 = vunpack.c.l.b16 %v1685
    %v1889 = vunpack.c.h.b16 %v1685
    %v1890 = vunpack.c.l.b16 %v1686
    %v1891 = vunpack.c.h.b16 %v1686
    %v1892 = vunpack.c.l.b16 %v1687
    %v1893 = vunpack.c.h.b16 %v1687
    %v1894 = vunpack.c.l.b16 %v1688
    %v1895 = vunpack.c.h.b16 %v1688
    %v1896 = vunpack.c.l.b16 %v1689
    %v1897 = vunpack.c.h.b16 %v1689
    %v1898 = vunpack.c.l.b16 %v1690
    %v1899 = vunpack.c.h.b16 %v1690
    %v1900 = vunpack.c.l.b16 %v1691
    %v1901 = vunpack.c.h.b16 %v1691
    %v1902 = vunpack.c.l.b16 %v1692
    %v1903 = vunpack.c.h.b16 %v1692
    %v1904 = vunpack.c.l.b16 %v1693
    %v1905 = vunpack.c.h.b16 %v1693
    %v1906 = vpack.c.b16 %v1858, %v1842
    %v1907 = vpack.c.b16 %v1859, %v1843
    %v1908 = vpack.c.b16 %v1860, %v1844
    %v1909 = vpack.c.b16 %v1861, %v1845
    %v1910 = vpack.c.b16 %v1862, %v1846
    %v1911 = vpack.c.b16 %v1863, %v1847
    %v1912 = vpack.c.b16 %v1864, %v1848
    %v1913 = vpack.c.b16 %v1865, %v1849
    %v1914 = vpack.c.b16 %v1866, %v1850
    %v1915 = vpack.c.b16 %v1867, %v1851
    %v1916 = vpack.c.b16 %v1868, %v1852
    %v1917 = vpack.c.b16 %v1869, %v1853
    %v1918 = vpack.c.b16 %v1870, %v1854
    %v1919 = vpack.c.b16 %v1871, %v1855
    %v1920 = vpack.c.b16 %v1872, %v1856
    %v1921 = vpack.c.b16 %v1873, %v1857
    %v1922 = vpack.c.b16 %v1890, %v1874
    %v1923 = vpack.c.b16 %v1891, %v1875
    %v1924 = vpack.c.b16 %v1892, %v1876
    %v1925 = vpack.c.b16 %v1893, %v1877
    %v1926 = vpack.c.b16 %v1894, %v1878
    %v1927 = vpack.c.b16 %v1895, %v1879
    %v1928 = vpack.c.b16 %v1896, %v1880
    %v1929 = vpack.c.b16 %v1897, %v1881
    %v1930 = vpack.c.b16 %v1898, %v1882
    %v1931 = vpack.c.b16 %v1899, %v1883
    %v1932 = vpack.c.b16 %v1900, %v1884
    %v1933 = vpack.c.b16 %v1901, %v1885
    %v1934 = vpack.c.b16 %v1902, %v1886
    %v1935 = vpack.c.b16 %v1903, %v1887
    %v1936 = vpack.c.b16 %v1904, %v1888
    %v1937 = vpack.c.b16 %v1905, %v1889
    %v1971 = vsel %vm160, %v1727, 0
    %1973 = vmatprep.subr.bf16.mxu0 %v1907
    %1974 = vmatpush1.bf16.msra.mxu0 %v1906
    %1975 = vmatprep.subr.bf16.mxu0 %v1923
    %1976 = vmatpush1.bf16.msra.mxu0 %v1922
    %1977 = vmatprep.subr.bf16.mxu0 0
    %1978 = vmatpush1.bf16.msra.mxu0 0
    %1979 = vmatprep.subr.bf16.mxu0 0
    %1980 = vmatpush1.bf16.msra.mxu0 0
    %1981 = vmatprep.subr.bf16.mxu0 0
    %1982 = vmatpush1.bf16.msra.mxu0 0
    %1983 = vmatprep.subr.bf16.mxu0 0
    %1984 = vmatpush1.bf16.msra.mxu0 0
    %1985 = vmatprep.subr.bf16.mxu0 0
    %1986 = vmatpush1.bf16.msra.mxu0 0
    %1987 = vmatprep.subr.bf16.mxu0 0
    %1988 = vmatpush1.bf16.msra.mxu0 0
    %1989 = vmatprep.subr.bf16.mxu0 0
    %1990 = vmatpush1.bf16.msra.mxu0 0
    %1991 = vmatprep.subr.bf16.mxu0 0
    %1992 = vmatpush1.bf16.msra.mxu0 0
    %1993 = vmatprep.subr.bf16.mxu0 0
    %1994 = vmatpush1.bf16.msra.mxu0 0
    %1995 = vmatprep.subr.bf16.mxu0 0
    %1996 = vmatpush1.bf16.msra.mxu0 0
    %1997 = vmatprep.subr.bf16.mxu0 0
    %1998 = vmatpush1.bf16.msra.mxu0 0
    %1999 = vmatprep.subr.bf16.mxu0 0
    %2000 = vmatpush1.bf16.msra.mxu0 0
    %2001 = vmatprep.subr.bf16.mxu0 0
    %2002 = vmatpush1.bf16.msra.mxu0 0
    %2003 = vmatprep.subr.bf16.mxu0 0
    %2004 = vmatpush1.bf16.msra.mxu0 0
    %2005 = vmatprep.mubr.bf16.mxu0 0
    %2006 = vmatmul.mubr.bf16.gmra.mrb[0].mxu0 %v1971
    %v2007 = vpop.f32.mrb[0].mxu0
    %v2008 = vadd.f32 %v1733, %v2007
    %v2009 = vpop.f32.mrb[0].mxu0
    %v2010 = vadd.f32 %v1737, %v2009
    %v2011 = vpop.f32.mrb[0].mxu0
    %v2012 = vadd.f32 %v1733, %v2011
    %v2013 = vpop.f32.mrb[0].mxu0
    %v2014 = vadd.f32 %v1737, %v2013
    %2015 = vdwg.mxu0
    %2016 = vmatprep.subr.bf16.mxu0 %v1909
    %2017 = vmatpush1.bf16.msra.mxu0 %v1908
    %2018 = vmatprep.subr.bf16.mxu0 %v1925
    %2019 = vmatpush1.bf16.msra.mxu0 %v1924
    %2020 = vmatprep.subr.bf16.mxu0 0
    %2021 = vmatpush1.bf16.msra.mxu0 0
    %2022 = vmatprep.subr.bf16.mxu0 0
    %2023 = vmatpush1.bf16.msra.mxu0 0
    %2024 = vmatprep.subr.bf16.mxu0 0
    %2025 = vmatpush1.bf16.msra.mxu0 0
    %2026 = vmatprep.subr.bf16.mxu0 0
    %2027 = vmatpush1.bf16.msra.mxu0 0
    %2028 = vmatprep.subr.bf16.mxu0 0
    %2029 = vmatpush1.bf16.msra.mxu0 0
    %2030 = vmatprep.subr.bf16.mxu0 0
    %2031 = vmatpush1.bf16.msra.mxu0 0
    %2032 = vmatprep.subr.bf16.mxu0 0
    %2033 = vmatpush1.bf16.msra.mxu0 0
    %2034 = vmatprep.subr.bf16.mxu0 0
    %2035 = vmatpush1.bf16.msra.mxu0 0
    %2036 = vmatprep.subr.bf16.mxu0 0
    %2037 = vmatpush1.bf16.msra.mxu0 0
    %2038 = vmatprep.subr.bf16.mxu0 0
    %2039 = vmatpush1.bf16.msra.mxu0 0
    %2040 = vmatprep.subr.bf16.mxu0 0
    %2041 = vmatpush1.bf16.msra.mxu0 0
    %2042 = vmatprep.subr.bf16.mxu0 0
    %2043 = vmatpush1.bf16.msra.mxu0 0
    %2044 = vmatprep.subr.bf16.mxu0 0
    %2045 = vmatpush1.bf16.msra.mxu0 0
    %2046 = vmatprep.subr.bf16.mxu0 0
    %2047 = vmatpush1.bf16.msra.mxu0 0
    %2048 = vmatprep.mubr.bf16.mxu0 0
    %2049 = vmatmul.mubr.bf16.gmra.mrb[0].mxu0 %v1971
    %v2050 = vpop.f32.mrb[0].mxu0
    %v2051 = vadd.f32 %v1741, %v2050
    %v2052 = vpop.f32.mrb[0].mxu0
    %v2053 = vadd.f32 %v1745, %v2052
    %v2054 = vpop.f32.mrb[0].mxu0
    %v2055 = vadd.f32 %v1741, %v2054
    %v2056 = vpop.f32.mrb[0].mxu0
    %v2057 = vadd.f32 %v1745, %v2056
    %2058 = vdwg.mxu0
    %2059 = vmatprep.subr.bf16.mxu0 %v1911
    %2060 = vmatpush1.bf16.msra.mxu0 %v1910
    %2061 = vmatprep.subr.bf16.mxu0 %v1927
    %2062 = vmatpush1.bf16.msra.mxu0 %v1926
    %2063 = vmatprep.subr.bf16.mxu0 0
    %2064 = vmatpush1.bf16.msra.mxu0 0
    %2065 = vmatprep.subr.bf16.mxu0 0
    %2066 = vmatpush1.bf16.msra.mxu0 0
    %2067 = vmatprep.subr.bf16.mxu0 0
    %2068 = vmatpush1.bf16.msra.mxu0 0
    %2069 = vmatprep.subr.bf16.mxu0 0
    %2070 = vmatpush1.bf16.msra.mxu0 0
    %2071 = vmatprep.subr.bf16.mxu0 0
    %2072 = vmatpush1.bf16.msra.mxu0 0
    %2073 = vmatprep.subr.bf16.mxu0 0
    %2074 = vmatpush1.bf16.msra.mxu0 0
    %2075 = vmatprep.subr.bf16.mxu0 0
    %2076 = vmatpush1.bf16.msra.mxu0 0
    %2077 = vmatprep.subr.bf16.mxu0 0
    %2078 = vmatpush1.bf16.msra.mxu0 0
    %2079 = vmatprep.subr.bf16.mxu0 0
    %2080 = vmatpush1.bf16.msra.mxu0 0
    %2081 = vmatprep.subr.bf16.mxu0 0
    %2082 = vmatpush1.bf16.msra.mxu0 0
    %2083 = vmatprep.subr.bf16.mxu0 0
    %2084 = vmatpush1.bf16.msra.mxu0 0
    %2085 = vmatprep.subr.bf16.mxu0 0
    %2086 = vmatpush1.bf16.msra.mxu0 0
    %2087 = vmatprep.subr.bf16.mxu0 0
    %2088 = vmatpush1.bf16.msra.mxu0 0
    %2089 = vmatprep.subr.bf16.mxu0 0
    %2090 = vmatpush1.bf16.msra.mxu0 0
    %2091 = vmatprep.mubr.bf16.mxu0 0
    %2092 = vmatmul.mubr.bf16.gmra.mrb[0].mxu0 %v1971
    %v2093 = vpop.f32.mrb[0].mxu0
    %v2094 = vadd.f32 %v1749, %v2093
    %v2095 = vpop.f32.mrb[0].mxu0
    %v2096 = vadd.f32 %v1753, %v2095
    %v2097 = vpop.f32.mrb[0].mxu0
    %v2098 = vadd.f32 %v1749, %v2097
    %v2099 = vpop.f32.mrb[0].mxu0
    %v2100 = vadd.f32 %v1753, %v2099
    %2101 = vdwg.mxu0
    %2102 = vmatprep.subr.bf16.mxu0 %v1913
    %2103 = vmatpush1.bf16.msra.mxu0 %v1912
    %2104 = vmatprep.subr.bf16.mxu0 %v1929
    %2105 = vmatpush1.bf16.msra.mxu0 %v1928
    %2106 = vmatprep.subr.bf16.mxu0 0
    %2107 = vmatpush1.bf16.msra.mxu0 0
    %2108 = vmatprep.subr.bf16.mxu0 0
    %2109 = vmatpush1.bf16.msra.mxu0 0
    %2110 = vmatprep.subr.bf16.mxu0 0
    %2111 = vmatpush1.bf16.msra.mxu0 0
    %2112 = vmatprep.subr.bf16.mxu0 0
    %2113 = vmatpush1.bf16.msra.mxu0 0
    %2114 = vmatprep.subr.bf16.mxu0 0
    %2115 = vmatpush1.bf16.msra.mxu0 0
    %2116 = vmatprep.subr.bf16.mxu0 0
    %2117 = vmatpush1.bf16.msra.mxu0 0
    %2118 = vmatprep.subr.bf16.mxu0 0
    %2119 = vmatpush1.bf16.msra.mxu0 0
    %2120 = vmatprep.subr.bf16.mxu0 0
    %2121 = vmatpush1.bf16.msra.mxu0 0
    %2122 = vmatprep.subr.bf16.mxu0 0
    %2123 = vmatpush1.bf16.msra.mxu0 0
    %2124 = vmatprep.subr.bf16.mxu0 0
    %2125 = vmatpush1.bf16.msra.mxu0 0
    %2126 = vmatprep.subr.bf16.mxu0 0
    %2127 = vmatpush1.bf16.msra.mxu0 0
    %2128 = vmatprep.subr.bf16.mxu0 0
    %2129 = vmatpush1.bf16.msra.mxu0 0
    %2130 = vmatprep.subr.bf16.mxu0 0
    %2131 = vmatpush1.bf16.msra.mxu0 0
    %2132 = vmatprep.subr.bf16.mxu0 0
    %2133 = vmatpush1.bf16.msra.mxu0 0
    %2134 = vmatprep.mubr.bf16.mxu0 0
    %2135 = vmatmul.mubr.bf16.gmra.mrb[0].mxu0 %v1971
    %v2136 = vpop.f32.mrb[0].mxu0
    %v2137 = vadd.f32 %v1757, %v2136
    %v2138 = vpop.f32.mrb[0].mxu0
    %v2139 = vadd.f32 %v1761, %v2138
    %v2140 = vpop.f32.mrb[0].mxu0
    %v2141 = vadd.f32 %v1757, %v2140
    %v2142 = vpop.f32.mrb[0].mxu0
    %v2143 = vadd.f32 %v1761, %v2142
    %2144 = vdwg.mxu0
    %2145 = vmatprep.subr.bf16.mxu0 %v1915
    %2146 = vmatpush1.bf16.msra.mxu0 %v1914
    %2147 = vmatprep.subr.bf16.mxu0 %v1931
    %2148 = vmatpush1.bf16.msra.mxu0 %v1930
    %2149 = vmatprep.subr.bf16.mxu0 0
    %2150 = vmatpush1.bf16.msra.mxu0 0
    %2151 = vmatprep.subr.bf16.mxu0 0
    %2152 = vmatpush1.bf16.msra.mxu0 0
    %2153 = vmatprep.subr.bf16.mxu0 0
    %2154 = vmatpush1.bf16.msra.mxu0 0
    %2155 = vmatprep.subr.bf16.mxu0 0
    %2156 = vmatpush1.bf16.msra.mxu0 0
    %2157 = vmatprep.subr.bf16.mxu0 0
    %2158 = vmatpush1.bf16.msra.mxu0 0
    %2159 = vmatprep.subr.bf16.mxu0 0
    %2160 = vmatpush1.bf16.msra.mxu0 0
    %2161 = vmatprep.subr.bf16.mxu0 0
    %2162 = vmatpush1.bf16.msra.mxu0 0
    %2163 = vmatprep.subr.bf16.mxu0 0
    %2164 = vmatpush1.bf16.msra.mxu0 0
    %2165 = vmatprep.subr.bf16.mxu0 0
    %2166 = vmatpush1.bf16.msra.mxu0 0
    %2167 = vmatprep.subr.bf16.mxu0 0
    %2168 = vmatpush1.bf16.msra.mxu0 0
    %2169 = vmatprep.subr.bf16.mxu0 0
    %2170 = vmatpush1.bf16.msra.mxu0 0
    %2171 = vmatprep.subr.bf16.mxu0 0
    %2172 = vmatpush1.bf16.msra.mxu0 0
    %2173 = vmatprep.subr.bf16.mxu0 0
    %2174 = vmatpush1.bf16.msra.mxu0 0
    %2175 = vmatprep.subr.bf16.mxu0 0
    %2176 = vmatpush1.bf16.msra.mxu0 0
    %2177 = vmatprep.mubr.bf16.mxu0 0
    %2178 = vmatmul.mubr.bf16.gmra.mrb[0].mxu0 %v1971
    %v2179 = vpop.f32.mrb[0].mxu0
    %v2180 = vadd.f32 %v1765, %v2179
    %v2181 = vpop.f32.mrb[0].mxu0
    %v2182 = vadd.f32 %v1769, %v2181
    %v2183 = vpop.f32.mrb[0].mxu0
    %v2184 = vadd.f32 %v1765, %v2183
    %v2185 = vpop.f32.mrb[0].mxu0
    %v2186 = vadd.f32 %v1769, %v2185
    %2187 = vdwg.mxu0
    %2188 = vmatprep.subr.bf16.mxu0 %v1917
    %2189 = vmatpush1.bf16.msra.mxu0 %v1916
    %2190 = vmatprep.subr.bf16.mxu0 %v1933
    %2191 = vmatpush1.bf16.msra.mxu0 %v1932
    %2192 = vmatprep.subr.bf16.mxu0 0
    %2193 = vmatpush1.bf16.msra.mxu0 0
    %2194 = vmatprep.subr.bf16.mxu0 0
    %2195 = vmatpush1.bf16.msra.mxu0 0
    %2196 = vmatprep.subr.bf16.mxu0 0
    %2197 = vmatpush1.bf16.msra.mxu0 0
    %2198 = vmatprep.subr.bf16.mxu0 0
    %2199 = vmatpush1.bf16.msra.mxu0 0
    %2200 = vmatprep.subr.bf16.mxu0 0
    %2201 = vmatpush1.bf16.msra.mxu0 0
    %2202 = vmatprep.subr.bf16.mxu0 0
    %2203 = vmatpush1.bf16.msra.mxu0 0
    %2204 = vmatprep.subr.bf16.mxu0 0
    %2205 = vmatpush1.bf16.msra.mxu0 0
    %2206 = vmatprep.subr.bf16.mxu0 0
    %2207 = vmatpush1.bf16.msra.mxu0 0
    %2208 = vmatprep.subr.bf16.mxu0 0
    %2209 = vmatpush1.bf16.msra.mxu0 0
    %2210 = vmatprep.subr.bf16.mxu0 0
    %2211 = vmatpush1.bf16.msra.mxu0 0
    %2212 = vmatprep.subr.bf16.mxu0 0
    %2213 = vmatpush1.bf16.msra.mxu0 0
    %2214 = vmatprep.subr.bf16.mxu0 0
    %2215 = vmatpush1.bf16.msra.mxu0 0
    %2216 = vmatprep.subr.bf16.mxu0 0
    %2217 = vmatpush1.bf16.msra.mxu0 0
    %2218 = vmatprep.subr.bf16.mxu0 0
    %2219 = vmatpush1.bf16.msra.mxu0 0
    %2220 = vmatprep.mubr.bf16.mxu0 0
    %2221 = vmatmul.mubr.bf16.gmra.mrb[0].mxu0 %v1971
    %v2222 = vpop.f32.mrb[0].mxu0
    %v2223 = vadd.f32 %v1773, %v2222
    %v2224 = vpop.f32.mrb[0].mxu0
    %v2225 = vadd.f32 %v1777, %v2224
    %v2226 = vpop.f32.mrb[0].mxu0
    %v2227 = vadd.f32 %v1773, %v2226
    %v2228 = vpop.f32.mrb[0].mxu0
    %v2229 = vadd.f32 %v1777, %v2228
    %2230 = vdwg.mxu0
    %2231 = vmatprep.subr.bf16.mxu0 %v1919
    %2232 = vmatpush1.bf16.msra.mxu0 %v1918
    %2233 = vmatprep.subr.bf16.mxu0 %v1935
    %2234 = vmatpush1.bf16.msra.mxu0 %v1934
    %2235 = vmatprep.subr.bf16.mxu0 0
    %2236 = vmatpush1.bf16.msra.mxu0 0
    %2237 = vmatprep.subr.bf16.mxu0 0
    %2238 = vmatpush1.bf16.msra.mxu0 0
    %2239 = vmatprep.subr.bf16.mxu0 0
    %2240 = vmatpush1.bf16.msra.mxu0 0
    %2241 = vmatprep.subr.bf16.mxu0 0
    %2242 = vmatpush1.bf16.msra.mxu0 0
    %2243 = vmatprep.subr.bf16.mxu0 0
    %2244 = vmatpush1.bf16.msra.mxu0 0
    %2245 = vmatprep.subr.bf16.mxu0 0
    %2246 = vmatpush1.bf16.msra.mxu0 0
    %2247 = vmatprep.subr.bf16.mxu0 0
    %2248 = vmatpush1.bf16.msra.mxu0 0
    %2249 = vmatprep.subr.bf16.mxu0 0
    %2250 = vmatpush1.bf16.msra.mxu0 0
    %2251 = vmatprep.subr.bf16.mxu0 0
    %2252 = vmatpush1.bf16.msra.mxu0 0
    %2253 = vmatprep.subr.bf16.mxu0 0
    %2254 = vmatpush1.bf16.msra.mxu0 0
    %2255 = vmatprep.subr.bf16.mxu0 0
    %2256 = vmatpush1.bf16.msra.mxu0 0
    %2257 = vmatprep.subr.bf16.mxu0 0
    %2258 = vmatpush1.bf16.msra.mxu0 0
    %2259 = vmatprep.subr.bf16.mxu0 0
    %2260 = vmatpush1.bf16.msra.mxu0 0
    %2261 = vmatprep.subr.bf16.mxu0 0
    %2262 = vmatpush1.bf16.msra.mxu0 0
    %2263 = vmatprep.mubr.bf16.mxu0 0
    %2264 = vmatmul.mubr.bf16.gmra.mrb[0].mxu0 %v1971
    %v2265 = vpop.f32.mrb[0].mxu0
    %v2266 = vadd.f32 %v1781, %v2265
    %v2267 = vpop.f32.mrb[0].mxu0
    %v2268 = vadd.f32 %v1785, %v2267
    %v2269 = vpop.f32.mrb[0].mxu0
    %v2270 = vadd.f32 %v1781, %v2269
    %v2271 = vpop.f32.mrb[0].mxu0
    %v2272 = vadd.f32 %v1785, %v2271
    %2273 = vdwg.mxu0
    %2274 = vmatprep.subr.bf16.mxu0 %v1921
    %2275 = vmatpush1.bf16.msra.mxu0 %v1920
    %2276 = vmatprep.subr.bf16.mxu0 %v1937
    %2277 = vmatpush1.bf16.msra.mxu0 %v1936
    %2278 = vmatprep.subr.bf16.mxu0 0
    %2279 = vmatpush1.bf16.msra.mxu0 0
    %2280 = vmatprep.subr.bf16.mxu0 0
    %2281 = vmatpush1.bf16.msra.mxu0 0
    %2282 = vmatprep.subr.bf16.mxu0 0
    %2283 = vmatpush1.bf16.msra.mxu0 0
    %2284 = vmatprep.subr.bf16.mxu0 0
    %2285 = vmatpush1.bf16.msra.mxu0 0
    %2286 = vmatprep.subr.bf16.mxu0 0
    %2287 = vmatpush1.bf16.msra.mxu0 0
    %2288 = vmatprep.subr.bf16.mxu0 0
    %2289 = vmatpush1.bf16.msra.mxu0 0
    %2290 = vmatprep.subr.bf16.mxu0 0
    %2291 = vmatpush1.bf16.msra.mxu0 0
    %2292 = vmatprep.subr.bf16.mxu0 0
    %2293 = vmatpush1.bf16.msra.mxu0 0
    %2294 = vmatprep.subr.bf16.mxu0 0
    %2295 = vmatpush1.bf16.msra.mxu0 0
    %2296 = vmatprep.subr.bf16.mxu0 0
    %2297 = vmatpush1.bf16.msra.mxu0 0
    %2298 = vmatprep.subr.bf16.mxu0 0
    %2299 = vmatpush1.bf16.msra.mxu0 0
    %2300 = vmatprep.subr.bf16.mxu0 0
    %2301 = vmatpush1.bf16.msra.mxu0 0
    %2302 = vmatprep.subr.bf16.mxu0 0
    %2303 = vmatpush1.bf16.msra.mxu0 0
    %2304 = vmatprep.subr.bf16.mxu0 0
    %2305 = vmatpush1.bf16.msra.mxu0 0
    %2306 = vmatprep.mubr.bf16.mxu0 0
    %2307 = vmatmul.mubr.bf16.gmra.mrb[0].mxu0 %v1971
    %v2308 = vpop.f32.mrb[0].mxu0
    %v2309 = vadd.f32 %v1789, %v2308
    %v2310 = vpop.f32.mrb[0].mxu0
    %v2311 = vadd.f32 %v1793, %v2310
    %v2312 = vpop.f32.mrb[0].mxu0
    %v2313 = vadd.f32 %v1789, %v2312
    %v2314 = vpop.f32.mrb[0].mxu0
    %v2315 = vadd.f32 %v1793, %v2314
    %2316 = vdwg.mxu0
    %v2317 = vmax.f32 %v2008, 0.0
    %v2318 = vmax.f32 %v2010, 0.0
    %v2319 = vmax.f32 %v2051, 0.0
    %v2320 = vmax.f32 %v2053, 0.0
    %v2321 = vmax.f32 %v2094, 0.0
    %v2322 = vmax.f32 %v2096, 0.0
    %v2323 = vmax.f32 %v2137, 0.0
    %v2324 = vmax.f32 %v2139, 0.0
    %v2325 = vmax.f32 %v2180, 0.0
    %v2326 = vmax.f32 %v2182, 0.0
    %v2327 = vmax.f32 %v2223, 0.0
    %v2328 = vmax.f32 %v2225, 0.0
    %v2329 = vmax.f32 %v2266, 0.0
    %v2330 = vmax.f32 %v2268, 0.0
    %v2331 = vmax.f32 %v2309, 0.0
    %v2332 = vmax.f32 %v2311, 0.0
    %v2333 = vmax.f32 %v2012, 0.0
    %v2334 = vmax.f32 %v2014, 0.0
    %v2335 = vmax.f32 %v2055, 0.0
    %v2336 = vmax.f32 %v2057, 0.0
    %v2337 = vmax.f32 %v2098, 0.0
    %v2338 = vmax.f32 %v2100, 0.0
    %v2339 = vmax.f32 %v2141, 0.0
    %v2340 = vmax.f32 %v2143, 0.0
    %v2341 = vmax.f32 %v2184, 0.0
    %v2342 = vmax.f32 %v2186, 0.0
    %v2343 = vmax.f32 %v2227, 0.0
    %v2344 = vmax.f32 %v2229, 0.0
    %v2345 = vmax.f32 %v2270, 0.0
    %v2346 = vmax.f32 %v2272, 0.0
    %v2347 = vmax.f32 %v2313, 0.0
    %v2348 = vmax.f32 %v2315, 0.0
    %v2349 = vpack.c.bf16 %v2333, %v2317
    %v2350 = vpack.c.bf16 %v2334, %v2318
    %v2351 = vpack.c.bf16 %v2335, %v2319
    %v2352 = vpack.c.bf16 %v2336, %v2320
    %v2353 = vpack.c.bf16 %v2337, %v2321
    %v2354 = vpack.c.bf16 %v2338, %v2322
    %v2355 = vpack.c.bf16 %v2339, %v2323
    %v2356 = vpack.c.bf16 %v2340, %v2324
    %v2357 = vpack.c.bf16 %v2341, %v2325
    %v2358 = vpack.c.bf16 %v2342, %v2326
    %v2359 = vpack.c.bf16 %v2343, %v2327
    %v2360 = vpack.c.bf16 %v2344, %v2328
    %v2361 = vpack.c.bf16 %v2345, %v2329
    %v2362 = vpack.c.bf16 %v2346, %v2330
    %v2363 = vpack.c.bf16 %v2347, %v2331
    %v2364 = vpack.c.bf16 %v2348, %v2332
    %v2365 = vlaneseq
    %v2366 = vshrl.u32 %v2365, 7
    %v2367 = vsub.s32 4, %v2366
    %v2368 = vrot.slane %v46, %v2367
    %v2401 = vunpack.c.l.b16 %v1695
    %v2402 = vunpack.c.h.b16 %v1695
    %v2403 = vunpack.c.l.b16 %v1696
    %v2404 = vunpack.c.h.b16 %v1696
    %v2405 = vunpack.c.l.b16 %v1697
    %v2406 = vunpack.c.h.b16 %v1697
    %v2407 = vunpack.c.l.b16 %v1698
    %v2408 = vunpack.c.h.b16 %v1698
    %v2409 = vunpack.c.l.b16 %v1699
    %v2410 = vunpack.c.h.b16 %v1699
    %v2411 = vunpack.c.l.b16 %v1700
    %v2412 = vunpack.c.h.b16 %v1700
    %v2413 = vunpack.c.l.b16 %v1701
    %v2414 = vunpack.c.h.b16 %v1701
    %v2415 = vunpack.c.l.b16 %v1702
    %v2416 = vunpack.c.h.b16 %v1702
    %v2417 = vunpack.c.l.b16 %v1703
    %v2418 = vunpack.c.h.b16 %v1703
    %v2419 = vunpack.c.l.b16 %v1704
    %v2420 = vunpack.c.h.b16 %v1704
    %v2421 = vunpack.c.l.b16 %v1705
    %v2422 = vunpack.c.h.b16 %v1705
    %v2423 = vunpack.c.l.b16 %v1706
    %v2424 = vunpack.c.h.b16 %v1706
    %v2425 = vunpack.c.l.b16 %v1707
    %v2426 = vunpack.c.h.b16 %v1707
    %v2427 = vunpack.c.l.b16 %v1708
    %v2428 = vunpack.c.h.b16 %v1708
    %v2429 = vunpack.c.l.b16 %v1709
    %v2430 = vunpack.c.h.b16 %v1709
    %v2431 = vunpack.c.l.b16 %v1710
    %v2432 = vunpack.c.h.b16 %v1710
    %v2433 = vunpack.c.l.b16 %v1711
    %v2434 = vunpack.c.h.b16 %v1711
    %v2435 = vunpack.c.l.b16 %v1712
    %v2436 = vunpack.c.h.b16 %v1712
    %v2437 = vunpack.c.l.b16 %v1713
    %v2438 = vunpack.c.h.b16 %v1713
    %v2439 = vunpack.c.l.b16 %v1714
    %v2440 = vunpack.c.h.b16 %v1714
    %v2441 = vunpack.c.l.b16 %v1715
    %v2442 = vunpack.c.h.b16 %v1715
    %v2443 = vunpack.c.l.b16 %v1716
    %v2444 = vunpack.c.h.b16 %v1716
    %v2445 = vunpack.c.l.b16 %v1717
    %v2446 = vunpack.c.h.b16 %v1717
    %v2447 = vunpack.c.l.b16 %v1718
    %v2448 = vunpack.c.h.b16 %v1718
    %v2449 = vunpack.c.l.b16 %v1719
    %v2450 = vunpack.c.h.b16 %v1719
    %v2451 = vunpack.c.l.b16 %v1720
    %v2452 = vunpack.c.h.b16 %v1720
    %v2453 = vunpack.c.l.b16 %v1721
    %v2454 = vunpack.c.h.b16 %v1721
    %v2455 = vunpack.c.l.b16 %v1722
    %v2456 = vunpack.c.h.b16 %v1722
    %v2457 = vunpack.c.l.b16 %v1723
    %v2458 = vunpack.c.h.b16 %v1723
    %v2459 = vunpack.c.l.b16 %v1724
    %v2460 = vunpack.c.h.b16 %v1724
    %v2461 = vunpack.c.l.b16 %v1725
    %v2462 = vunpack.c.h.b16 %v1725
    %v2463 = vunpack.c.l.b16 %v1726
    %v2464 = vunpack.c.h.b16 %v1726
    %v2465 = vpack.c.b16 %v2417, %v2401
    %v2466 = vpack.c.b16 %v2418, %v2402
    %v2467 = vpack.c.b16 %v2419, %v2403
    %v2468 = vpack.c.b16 %v2420, %v2404
    %v2469 = vpack.c.b16 %v2421, %v2405
    %v2470 = vpack.c.b16 %v2422, %v2406
    %v2471 = vpack.c.b16 %v2423, %v2407
    %v2472 = vpack.c.b16 %v2424, %v2408
    %v2473 = vpack.c.b16 %v2425, %v2409
    %v2474 = vpack.c.b16 %v2426, %v2410
    %v2475 = vpack.c.b16 %v2427, %v2411
    %v2476 = vpack.c.b16 %v2428, %v2412
    %v2477 = vpack.c.b16 %v2429, %v2413
    %v2478 = vpack.c.b16 %v2430, %v2414
    %v2479 = vpack.c.b16 %v2431, %v2415
    %v2480 = vpack.c.b16 %v2432, %v2416
    %v2481 = vpack.c.b16 %v2449, %v2433
    %v2482 = vpack.c.b16 %v2450, %v2434
    %v2483 = vpack.c.b16 %v2451, %v2435
    %v2484 = vpack.c.b16 %v2452, %v2436
    %v2485 = vpack.c.b16 %v2453, %v2437
    %v2486 = vpack.c.b16 %v2454, %v2438
    %v2487 = vpack.c.b16 %v2455, %v2439
    %v2488 = vpack.c.b16 %v2456, %v2440
    %v2489 = vpack.c.b16 %v2457, %v2441
    %v2490 = vpack.c.b16 %v2458, %v2442
    %v2491 = vpack.c.b16 %v2459, %v2443
    %v2492 = vpack.c.b16 %v2460, %v2444
    %v2493 = vpack.c.b16 %v2461, %v2445
    %v2494 = vpack.c.b16 %v2462, %v2446
    %v2495 = vpack.c.b16 %v2463, %v2447
    %v2496 = vpack.c.b16 %v2464, %v2448
    %2529 = vmatprep.subr.bf16.mxu0 %v2466
    %2530 = vmatpush1.bf16.xpose.msra.mxu0 %v2465
    %2531 = vmatprep.subr.bf16.mxu0 %v2482
    %2532 = vmatpush1.bf16.xpose.msra.mxu0 %v2481
    %2533 = vmatprep.subr.bf16.mxu0 0
    %2534 = vmatpush1.bf16.xpose.msra.mxu0 0
    %2535 = vmatprep.subr.bf16.mxu0 0
    %2536 = vmatpush1.bf16.xpose.msra.mxu0 0
    %2537 = vmatprep.subr.bf16.mxu0 0
    %2538 = vmatpush1.bf16.xpose.msra.mxu0 0
    %2539 = vmatprep.subr.bf16.mxu0 0
    %2540 = vmatpush1.bf16.xpose.msra.mxu0 0
    %2541 = vmatprep.subr.bf16.mxu0 0
    %2542 = vmatpush1.bf16.xpose.msra.mxu0 0
    %2543 = vmatprep.subr.bf16.mxu0 0
    %2544 = vmatpush1.bf16.xpose.msra.mxu0 0
    %2545 = vmatprep.subr.bf16.mxu0 0
    %2546 = vmatpush1.bf16.xpose.msra.mxu0 0
    %2547 = vmatprep.subr.bf16.mxu0 0
    %2548 = vmatpush1.bf16.xpose.msra.mxu0 0
    %2549 = vmatprep.subr.bf16.mxu0 0
    %2550 = vmatpush1.bf16.xpose.msra.mxu0 0
    %2551 = vmatprep.subr.bf16.mxu0 0
    %2552 = vmatpush1.bf16.xpose.msra.mxu0 0
    %2553 = vmatprep.subr.bf16.mxu0 0
    %2554 = vmatpush1.bf16.xpose.msra.mxu0 0
    %2555 = vmatprep.subr.bf16.mxu0 0
    %2556 = vmatpush1.bf16.xpose.msra.mxu0 0
    %2557 = vmatprep.subr.bf16.mxu0 0
    %2558 = vmatpush1.bf16.xpose.msra.mxu0 0
    %2559 = vmatprep.subr.bf16.mxu0 0
    %2560 = vmatpush1.bf16.xpose.msra.mxu0 0
    %2561 = vmatprep.mubr.bf16.mxu0 %v2350
    %2562 = vmatmul.mubr.bf16.gmra.mrb[0].mxu0 %v2349
    %v2563 = vpop.f32.mrb[0].mxu0
    %v2564 = vadd.f32 %v2368, %v2563
    %v2565 = vpop.f32.mrb[0].mxu0
    %v2566 = vpop.f32.mrb[0].mxu0
    %v2567 = vadd.f32 %v2368, %v2566
    %v2568 = vpop.f32.mrb[0].mxu0
    %2569 = vdwg.mxu0
    %2570 = vmatprep.subr.bf16.mxu0 %v2468
    %2571 = vmatpush1.bf16.xpose.msra.mxu0 %v2467
    %2572 = vmatprep.subr.bf16.mxu0 %v2484
    %2573 = vmatpush1.bf16.xpose.msra.mxu0 %v2483
    %2574 = vmatprep.subr.bf16.mxu0 0
    %2575 = vmatpush1.bf16.xpose.msra.mxu0 0
    %2576 = vmatprep.subr.bf16.mxu0 0
    %2577 = vmatpush1.bf16.xpose.msra.mxu0 0
    %2578 = vmatprep.subr.bf16.mxu0 0
    %2579 = vmatpush1.bf16.xpose.msra.mxu0 0
    %2580 = vmatprep.subr.bf16.mxu0 0
    %2581 = vmatpush1.bf16.xpose.msra.mxu0 0
    %2582 = vmatprep.subr.bf16.mxu0 0
    %2583 = vmatpush1.bf16.xpose.msra.mxu0 0
    %2584 = vmatprep.subr.bf16.mxu0 0
    %2585 = vmatpush1.bf16.xpose.msra.mxu0 0
    %2586 = vmatprep.subr.bf16.mxu0 0
    %2587 = vmatpush1.bf16.xpose.msra.mxu0 0
    %2588 = vmatprep.subr.bf16.mxu0 0
    %2589 = vmatpush1.bf16.xpose.msra.mxu0 0
    %2590 = vmatprep.subr.bf16.mxu0 0
    %2591 = vmatpush1.bf16.xpose.msra.mxu0 0
    %2592 = vmatprep.subr.bf16.mxu0 0
    %2593 = vmatpush1.bf16.xpose.msra.mxu0 0
    %2594 = vmatprep.subr.bf16.mxu0 0
    %2595 = vmatpush1.bf16.xpose.msra.mxu0 0
    %2596 = vmatprep.subr.bf16.mxu0 0
    %2597 = vmatpush1.bf16.xpose.msra.mxu0 0
    %2598 = vmatprep.subr.bf16.mxu0 0
    %2599 = vmatpush1.bf16.xpose.msra.mxu0 0
    %2600 = vmatprep.subr.bf16.mxu0 0
    %2601 = vmatpush1.bf16.xpose.msra.mxu0 0
    %2602 = vmatprep.mubr.bf16.mxu0 %v2352
    %2603 = vmatmul.mubr.bf16.gmra.mrb[0].mxu0 %v2351
    %v2604 = vpop.f32.mrb[0].mxu0
    %v2605 = vadd.f32 %v2564, %v2604
    %v2606 = vpop.f32.mrb[0].mxu0
    %v2607 = vpop.f32.mrb[0].mxu0
    %v2608 = vadd.f32 %v2567, %v2607
    %v2609 = vpop.f32.mrb[0].mxu0
    %2610 = vdwg.mxu0
    %2611 = vmatprep.subr.bf16.mxu0 %v2470
    %2612 = vmatpush1.bf16.xpose.msra.mxu0 %v2469
    %2613 = vmatprep.subr.bf16.mxu0 %v2486
    %2614 = vmatpush1.bf16.xpose.msra.mxu0 %v2485
    %2615 = vmatprep.subr.bf16.mxu0 0
    %2616 = vmatpush1.bf16.xpose.msra.mxu0 0
    %2617 = vmatprep.subr.bf16.mxu0 0
    %2618 = vmatpush1.bf16.xpose.msra.mxu0 0
    %2619 = vmatprep.subr.bf16.mxu0 0
    %2620 = vmatpush1.bf16.xpose.msra.mxu0 0
    %2621 = vmatprep.subr.bf16.mxu0 0
    %2622 = vmatpush1.bf16.xpose.msra.mxu0 0
    %2623 = vmatprep.subr.bf16.mxu0 0
    %2624 = vmatpush1.bf16.xpose.msra.mxu0 0
    %2625 = vmatprep.subr.bf16.mxu0 0
    %2626 = vmatpush1.bf16.xpose.msra.mxu0 0
    %2627 = vmatprep.subr.bf16.mxu0 0
    %2628 = vmatpush1.bf16.xpose.msra.mxu0 0
    %2629 = vmatprep.subr.bf16.mxu0 0
    %2630 = vmatpush1.bf16.xpose.msra.mxu0 0
    %2631 = vmatprep.subr.bf16.mxu0 0
    %2632 = vmatpush1.bf16.xpose.msra.mxu0 0
    %2633 = vmatprep.subr.bf16.mxu0 0
    %2634 = vmatpush1.bf16.xpose.msra.mxu0 0
    %2635 = vmatprep.subr.bf16.mxu0 0
    %2636 = vmatpush1.bf16.xpose.msra.mxu0 0
    %2637 = vmatprep.subr.bf16.mxu0 0
    %2638 = vmatpush1.bf16.xpose.msra.mxu0 0
    %2639 = vmatprep.subr.bf16.mxu0 0
    %2640 = vmatpush1.bf16.xpose.msra.mxu0 0
    %2641 = vmatprep.subr.bf16.mxu0 0
    %2642 = vmatpush1.bf16.xpose.msra.mxu0 0
    %2643 = vmatprep.mubr.bf16.mxu0 %v2354
    %2644 = vmatmul.mubr.bf16.gmra.mrb[0].mxu0 %v2353
    %v2645 = vpop.f32.mrb[0].mxu0
    %v2646 = vadd.f32 %v2605, %v2645
    %v2647 = vpop.f32.mrb[0].mxu0
    %v2648 = vpop.f32.mrb[0].mxu0
    %v2649 = vadd.f32 %v2608, %v2648
    %v2650 = vpop.f32.mrb[0].mxu0
    %2651 = vdwg.mxu0
    %2652 = vmatprep.subr.bf16.mxu0 %v2472
    %2653 = vmatpush1.bf16.xpose.msra.mxu0 %v2471
    %2654 = vmatprep.subr.bf16.mxu0 %v2488
    %2655 = vmatpush1.bf16.xpose.msra.mxu0 %v2487
    %2656 = vmatprep.subr.bf16.mxu0 0
    %2657 = vmatpush1.bf16.xpose.msra.mxu0 0
    %2658 = vmatprep.subr.bf16.mxu0 0
    %2659 = vmatpush1.bf16.xpose.msra.mxu0 0
    %2660 = vmatprep.subr.bf16.mxu0 0
    %2661 = vmatpush1.bf16.xpose.msra.mxu0 0
    %2662 = vmatprep.subr.bf16.mxu0 0
    %2663 = vmatpush1.bf16.xpose.msra.mxu0 0
    %2664 = vmatprep.subr.bf16.mxu0 0
    %2665 = vmatpush1.bf16.xpose.msra.mxu0 0
    %2666 = vmatprep.subr.bf16.mxu0 0
    %2667 = vmatpush1.bf16.xpose.msra.mxu0 0
    %2668 = vmatprep.subr.bf16.mxu0 0
    %2669 = vmatpush1.bf16.xpose.msra.mxu0 0
    %2670 = vmatprep.subr.bf16.mxu0 0
    %2671 = vmatpush1.bf16.xpose.msra.mxu0 0
    %2672 = vmatprep.subr.bf16.mxu0 0
    %2673 = vmatpush1.bf16.xpose.msra.mxu0 0
    %2674 = vmatprep.subr.bf16.mxu0 0
    %2675 = vmatpush1.bf16.xpose.msra.mxu0 0
    %2676 = vmatprep.subr.bf16.mxu0 0
    %2677 = vmatpush1.bf16.xpose.msra.mxu0 0
    %2678 = vmatprep.subr.bf16.mxu0 0
    %2679 = vmatpush1.bf16.xpose.msra.mxu0 0
    %2680 = vmatprep.subr.bf16.mxu0 0
    %2681 = vmatpush1.bf16.xpose.msra.mxu0 0
    %2682 = vmatprep.subr.bf16.mxu0 0
    %2683 = vmatpush1.bf16.xpose.msra.mxu0 0
    %2684 = vmatprep.mubr.bf16.mxu0 %v2356
    %2685 = vmatmul.mubr.bf16.gmra.mrb[0].mxu0 %v2355
    %v2686 = vpop.f32.mrb[0].mxu0
    %v2687 = vadd.f32 %v2646, %v2686
    %v2688 = vpop.f32.mrb[0].mxu0
    %v2689 = vpop.f32.mrb[0].mxu0
    %v2690 = vadd.f32 %v2649, %v2689
    %v2691 = vpop.f32.mrb[0].mxu0
    %2692 = vdwg.mxu0
    %2693 = vmatprep.subr.bf16.mxu0 %v2474
    %2694 = vmatpush1.bf16.xpose.msra.mxu0 %v2473
    %2695 = vmatprep.subr.bf16.mxu0 %v2490
    %2696 = vmatpush1.bf16.xpose.msra.mxu0 %v2489
    %2697 = vmatprep.subr.bf16.mxu0 0
    %2698 = vmatpush1.bf16.xpose.msra.mxu0 0
    %2699 = vmatprep.subr.bf16.mxu0 0
    %2700 = vmatpush1.bf16.xpose.msra.mxu0 0
    %2701 = vmatprep.subr.bf16.mxu0 0
    %2702 = vmatpush1.bf16.xpose.msra.mxu0 0
    %2703 = vmatprep.subr.bf16.mxu0 0
    %2704 = vmatpush1.bf16.xpose.msra.mxu0 0
    %2705 = vmatprep.subr.bf16.mxu0 0
    %2706 = vmatpush1.bf16.xpose.msra.mxu0 0
    %2707 = vmatprep.subr.bf16.mxu0 0
    %2708 = vmatpush1.bf16.xpose.msra.mxu0 0
    %2709 = vmatprep.subr.bf16.mxu0 0
    %2710 = vmatpush1.bf16.xpose.msra.mxu0 0
    %2711 = vmatprep.subr.bf16.mxu0 0
    %2712 = vmatpush1.bf16.xpose.msra.mxu0 0
    %2713 = vmatprep.subr.bf16.mxu0 0
    %2714 = vmatpush1.bf16.xpose.msra.mxu0 0
    %2715 = vmatprep.subr.bf16.mxu0 0
    %2716 = vmatpush1.bf16.xpose.msra.mxu0 0
    %2717 = vmatprep.subr.bf16.mxu0 0
    %2718 = vmatpush1.bf16.xpose.msra.mxu0 0
    %2719 = vmatprep.subr.bf16.mxu0 0
    %2720 = vmatpush1.bf16.xpose.msra.mxu0 0
    %2721 = vmatprep.subr.bf16.mxu0 0
    %2722 = vmatpush1.bf16.xpose.msra.mxu0 0
    %2723 = vmatprep.subr.bf16.mxu0 0
    %2724 = vmatpush1.bf16.xpose.msra.mxu0 0
    %2725 = vmatprep.mubr.bf16.mxu0 %v2358
    %2726 = vmatmul.mubr.bf16.gmra.mrb[0].mxu0 %v2357
    %v2727 = vpop.f32.mrb[0].mxu0
    %v2728 = vadd.f32 %v2687, %v2727
    %v2729 = vpop.f32.mrb[0].mxu0
    %v2730 = vpop.f32.mrb[0].mxu0
    %v2731 = vadd.f32 %v2690, %v2730
    %v2732 = vpop.f32.mrb[0].mxu0
    %2733 = vdwg.mxu0
    %2734 = vmatprep.subr.bf16.mxu0 %v2476
    %2735 = vmatpush1.bf16.xpose.msra.mxu0 %v2475
    %2736 = vmatprep.subr.bf16.mxu0 %v2492
    %2737 = vmatpush1.bf16.xpose.msra.mxu0 %v2491
    %2738 = vmatprep.subr.bf16.mxu0 0
    %2739 = vmatpush1.bf16.xpose.msra.mxu0 0
    %2740 = vmatprep.subr.bf16.mxu0 0
    %2741 = vmatpush1.bf16.xpose.msra.mxu0 0
    %2742 = vmatprep.subr.bf16.mxu0 0
    %2743 = vmatpush1.bf16.xpose.msra.mxu0 0
    %2744 = vmatprep.subr.bf16.mxu0 0
    %2745 = vmatpush1.bf16.xpose.msra.mxu0 0
    %2746 = vmatprep.subr.bf16.mxu0 0
    %2747 = vmatpush1.bf16.xpose.msra.mxu0 0
    %2748 = vmatprep.subr.bf16.mxu0 0
    %2749 = vmatpush1.bf16.xpose.msra.mxu0 0
    %2750 = vmatprep.subr.bf16.mxu0 0
    %2751 = vmatpush1.bf16.xpose.msra.mxu0 0
    %2752 = vmatprep.subr.bf16.mxu0 0
    %2753 = vmatpush1.bf16.xpose.msra.mxu0 0
    %2754 = vmatprep.subr.bf16.mxu0 0
    %2755 = vmatpush1.bf16.xpose.msra.mxu0 0
    %2756 = vmatprep.subr.bf16.mxu0 0
    %2757 = vmatpush1.bf16.xpose.msra.mxu0 0
    %2758 = vmatprep.subr.bf16.mxu0 0
    %2759 = vmatpush1.bf16.xpose.msra.mxu0 0
    %2760 = vmatprep.subr.bf16.mxu0 0
    %2761 = vmatpush1.bf16.xpose.msra.mxu0 0
    %2762 = vmatprep.subr.bf16.mxu0 0
    %2763 = vmatpush1.bf16.xpose.msra.mxu0 0
    %2764 = vmatprep.subr.bf16.mxu0 0
    %2765 = vmatpush1.bf16.xpose.msra.mxu0 0
    %2766 = vmatprep.mubr.bf16.mxu0 %v2360
    %2767 = vmatmul.mubr.bf16.gmra.mrb[0].mxu0 %v2359
    %v2768 = vpop.f32.mrb[0].mxu0
    %v2769 = vadd.f32 %v2728, %v2768
    %v2770 = vpop.f32.mrb[0].mxu0
    %v2771 = vpop.f32.mrb[0].mxu0
    %v2772 = vadd.f32 %v2731, %v2771
    %v2773 = vpop.f32.mrb[0].mxu0
    %2774 = vdwg.mxu0
    %2775 = vmatprep.subr.bf16.mxu0 %v2478
    %2776 = vmatpush1.bf16.xpose.msra.mxu0 %v2477
    %2777 = vmatprep.subr.bf16.mxu0 %v2494
    %2778 = vmatpush1.bf16.xpose.msra.mxu0 %v2493
    %2779 = vmatprep.subr.bf16.mxu0 0
    %2780 = vmatpush1.bf16.xpose.msra.mxu0 0
    %2781 = vmatprep.subr.bf16.mxu0 0
    %2782 = vmatpush1.bf16.xpose.msra.mxu0 0
    %2783 = vmatprep.subr.bf16.mxu0 0
    %2784 = vmatpush1.bf16.xpose.msra.mxu0 0
    %2785 = vmatprep.subr.bf16.mxu0 0
    %2786 = vmatpush1.bf16.xpose.msra.mxu0 0
    %2787 = vmatprep.subr.bf16.mxu0 0
    %2788 = vmatpush1.bf16.xpose.msra.mxu0 0
    %2789 = vmatprep.subr.bf16.mxu0 0
    %2790 = vmatpush1.bf16.xpose.msra.mxu0 0
    %2791 = vmatprep.subr.bf16.mxu0 0
    %2792 = vmatpush1.bf16.xpose.msra.mxu0 0
    %2793 = vmatprep.subr.bf16.mxu0 0
    %2794 = vmatpush1.bf16.xpose.msra.mxu0 0
    %2795 = vmatprep.subr.bf16.mxu0 0
    %2796 = vmatpush1.bf16.xpose.msra.mxu0 0
    %2797 = vmatprep.subr.bf16.mxu0 0
    %2798 = vmatpush1.bf16.xpose.msra.mxu0 0
    %2799 = vmatprep.subr.bf16.mxu0 0
    %2800 = vmatpush1.bf16.xpose.msra.mxu0 0
    %2801 = vmatprep.subr.bf16.mxu0 0
    %2802 = vmatpush1.bf16.xpose.msra.mxu0 0
    %2803 = vmatprep.subr.bf16.mxu0 0
    %2804 = vmatpush1.bf16.xpose.msra.mxu0 0
    %2805 = vmatprep.subr.bf16.mxu0 0
    %2806 = vmatpush1.bf16.xpose.msra.mxu0 0
    %2807 = vmatprep.mubr.bf16.mxu0 %v2362
    %2808 = vmatmul.mubr.bf16.gmra.mrb[0].mxu0 %v2361
    %v2809 = vpop.f32.mrb[0].mxu0
    %v2810 = vadd.f32 %v2769, %v2809
    %v2811 = vpop.f32.mrb[0].mxu0
    %v2812 = vpop.f32.mrb[0].mxu0
    %v2813 = vadd.f32 %v2772, %v2812
    %v2814 = vpop.f32.mrb[0].mxu0
    %2815 = vdwg.mxu0
    %2816 = vmatprep.subr.bf16.mxu0 %v2480
    %2817 = vmatpush1.bf16.xpose.msra.mxu0 %v2479
    %2818 = vmatprep.subr.bf16.mxu0 %v2496
    %2819 = vmatpush1.bf16.xpose.msra.mxu0 %v2495
    %2820 = vmatprep.subr.bf16.mxu0 0
    %2821 = vmatpush1.bf16.xpose.msra.mxu0 0
    %2822 = vmatprep.subr.bf16.mxu0 0
    %2823 = vmatpush1.bf16.xpose.msra.mxu0 0
    %2824 = vmatprep.subr.bf16.mxu0 0
    %2825 = vmatpush1.bf16.xpose.msra.mxu0 0
    %2826 = vmatprep.subr.bf16.mxu0 0
    %2827 = vmatpush1.bf16.xpose.msra.mxu0 0
    %2828 = vmatprep.subr.bf16.mxu0 0
    %2829 = vmatpush1.bf16.xpose.msra.mxu0 0
    %2830 = vmatprep.subr.bf16.mxu0 0
    %2831 = vmatpush1.bf16.xpose.msra.mxu0 0
    %2832 = vmatprep.subr.bf16.mxu0 0
    %2833 = vmatpush1.bf16.xpose.msra.mxu0 0
    %2834 = vmatprep.subr.bf16.mxu0 0
    %2835 = vmatpush1.bf16.xpose.msra.mxu0 0
    %2836 = vmatprep.subr.bf16.mxu0 0
    %2837 = vmatpush1.bf16.xpose.msra.mxu0 0
    %2838 = vmatprep.subr.bf16.mxu0 0
    %2839 = vmatpush1.bf16.xpose.msra.mxu0 0
    %2840 = vmatprep.subr.bf16.mxu0 0
    %2841 = vmatpush1.bf16.xpose.msra.mxu0 0
    %2842 = vmatprep.subr.bf16.mxu0 0
    %2843 = vmatpush1.bf16.xpose.msra.mxu0 0
    %2844 = vmatprep.subr.bf16.mxu0 0
    %2845 = vmatpush1.bf16.xpose.msra.mxu0 0
    %2846 = vmatprep.subr.bf16.mxu0 0
    %2847 = vmatpush1.bf16.xpose.msra.mxu0 0
    %2848 = vmatprep.mubr.bf16.mxu0 %v2364
    %2849 = vmatmul.mubr.bf16.gmra.mrb[0].mxu0 %v2363
    %v2850 = vpop.f32.mrb[0].mxu0
    %v2851 = vadd.f32 %v2810, %v2850
    %v2852 = vpop.f32.mrb[0].mxu0
    %v2853 = vpop.f32.mrb[0].mxu0
    %v2854 = vadd.f32 %v2813, %v2853
    %v2855 = vpop.f32.mrb[0].mxu0
    %2856 = vdwg.mxu0
    %v2857 = vadd.f32 %v1659, %v2851
    %v2858 = vadd.f32 %v1660, %v2854
    %v2859 = vsel %vm160, %v2857, 0.0
    %2860 = vadd.xlane.f32.xlu0 %v2859
    %v2861 = vpop.xlane.xlu0 %2860
    %v2862 = vsel %vm160, %v2858, 0.0
    %2863 = vadd.xlane.f32.xlu0 %v2862
    %v2864 = vpop.xlane.xlu0 %2863
    %v2865 = vmul.f32 %v2861, %v250
    %v2866 = vmul.f32 %v2864, %v250
    %v2867 = vsub.f32 %v2857, %v2865
    %v2868 = vsub.f32 %v2858, %v2866
    %v2869 = vmul.f32 %v2867, %v2867
    %v2870 = vmul.f32 %v2868, %v2868
    %v2871 = vsel %vm160, %v2869, 0.0
    %2872 = vadd.xlane.f32.xlu0 %v2871
    %v2873 = vpop.xlane.xlu0 %2872
    %v2874 = vsel %vm160, %v2870, 0.0
    %2875 = vadd.xlane.f32.xlu0 %v2874
    %v2876 = vpop.xlane.xlu0 %2875
    %v2877 = vmul.f32 %v2873, %v250
    %v2878 = vmul.f32 %v2876, %v250
    %v2879 = vadd.f32 %v2877, 1e-05
    %v2880 = vadd.f32 %v2878, 1e-05
    %v2881 = vrsqrt.pop %v2879
    %v2882 = vrsqrt.pop %v2880
    %v2883 = vmul.f32 %v2867, %v2881
    %v2884 = vmul.f32 %v2868, %v2882
    %v2885 = vlaneseq
    %v2886 = vshrl.u32 %v2885, 7
    %v2887 = vsub.s32 2, %v2886
    %v2888 = vrot.slane %v46, %v2887
    %v2889 = vmul.f32 %v2883, %v2888
    %v2890 = vmul.f32 %v2884, %v2888
    %v2891 = vlaneseq
    %v2892 = vshrl.u32 %v2891, 7
    %v2893 = vsub.s32 3, %v2892
    %v2894 = vrot.slane %v46, %v2893
    %v2895 = vadd.f32 %v2889, %v2894
    %v2896 = vadd.f32 %v2890, %v2894
    %2897 = vst.msk [vmem:[#allocation5] sm:$0xff] %vm160, %v2895
    %2898 = vst.msk [vmem:[#allocation5 + $0x8] sm:$0xff] %vm160, %v2896
    // Predicated region
    $region22: #{time_series_transformer.1} parent=1 // pred_check
      _
    $region23: #{time_series_transformer.1} parent=1 // pred_check_branch
      %2900 = sbr.rel (0) target = $region25
    $region24: #{time_series_transformer.1} parent=1 // pred_region
      %s2902 = ssub.s32 256, 256
      %2903 = vsyncadd [#allocation4], %s2902
      %s2904 = sshll.u32 [#allocation5], 4
      %s2905 = int_to_ptr.vmem [resolvable:$true] %s2904
      %2910 = dma.vmem_to_hbm [thread:$0]  %s2905, 256, %s4, [#allocation4], 128, 128, 8
    $region25: #{time_series_transformer.1} parent=1 // pred_fallthru
      _
    // Predicated region
    $region26: #{time_series_transformer.1} parent=1 // pred_check
      _
    $region27: #{time_series_transformer.1} parent=1 // pred_check_branch
      %2912 = sbr.rel (0) target = $region29
    $region28: #{time_series_transformer.1} parent=1 // pred_region
      %2913 = dma.done [#allocation4], 256
    $region29: #{time_series_transformer.1} parent=1 // pred_fallthru
      _
    %2914 = vsyncpa [#allocation3], 1
    %2915 = vsyncpa [#allocation4], 1

</llo_original>
